<compile_context>
chip_gen: v7x
topology: tpu7x:2x2x1
jax: 0.10.0
libtpu: 0.0.40
codegen_flags: <defaults>
</compile_context>

<pallas_src>
import math

import jax
import jax.numpy as jnp
from jax.experimental import pallas as pl
from jax.experimental.pallas import tpu as pltpu

_LANE = 128      # vreg lane width
_SUBLANE = 8     # vreg sublane count (f32)


def _round_up(n, m):
    return ((n + m - 1) // m) * m


def _rnn_kernel(x_ref, wih0_ref, whh0_ref, b0_ref, wih1_ref, whh1_ref, b1_ref,
                out_ref):
    T, Bp, Hp = x_ref.shape

    # ---- Hoisted layer-0 input projection: one big MXU call for all steps.
    # bf16 operands, f32 accumulation.
    x_all = x_ref[...].astype(jnp.bfloat16)                     # (T, Bp, Hp)
    xp0 = jnp.dot(x_all.reshape(T * Bp, Hp), wih0_ref[...],
                  preferred_element_type=jnp.float32)
    xp0 = (xp0 + b0_ref[...]).reshape(T, Bp, Hp)                # f32 (T, Bp, Hp)

    whh0 = whh0_ref[...]                                        # bf16 (Hp, Hp)
    wih1 = wih1_ref[...]                                        # bf16 (Hp, Hp)
    whh1 = whh1_ref[...]                                        # bf16 (Hp, Hp)
    # Hoist the bias broadcast out of the unrolled loop.
    b1b = jnp.broadcast_to(b1_ref[...], (Bp, Hp))               # f32 (Bp, Hp)

    h0 = jnp.zeros((Bp, Hp), jnp.float32)
    h1 = jnp.zeros((Bp, Hp), jnp.float32)

    # ---- Recurrence over time, fully unrolled (T is small and static); the
    # hidden states stay in vregs between iterations.
    for t in range(T):
        # Layer-1 hidden dot depends only on h1_{t-1}: issue it alongside
        # layer-0's recurrence dot (off the h0_t-dependent chain).
        h1_rec = jnp.dot(h1.astype(jnp.bfloat16), whh1,
                         preferred_element_type=jnp.float32)
        # Layer 0: h0_t = tanh(x_t @ Wih0 + b0 + h0_{t-1} @ Whh0)
        h0 = jnp.tanh(xp0[t]
                      + jnp.dot(h0.astype(jnp.bfloat16), whh0,
                                preferred_element_type=jnp.float32))
        # Layer 1: h1_t = tanh(h0_t @ Wih1 + h1_{t-1} @ Whh1 + b1)
        h1 = jnp.tanh(jnp.dot(h0.astype(jnp.bfloat16), wih1,
                              preferred_element_type=jnp.float32)
                      + h1_rec + b1b)

    # Only the last timestep of the top layer is the module output.
    out_ref[...] = h1.astype(out_ref.dtype)


def pack_rnn_params(params, H):
    """One-time packing for the kernel: zero-pad every weight/bias to the
    MXU/vreg-native lane width; weights stored bf16 (MXU operands), biases f32
    (added in f32 on the VPU)."""
    wih0, whh0, b0, wih1, whh1, b1 = params
    Hp = _round_up(H, _LANE)
    pad_w = lambda w: jnp.pad(w, ((0, Hp - H), (0, Hp - H))).astype(jnp.bfloat16)
    pad_b = lambda b: jnp.pad(b, ((0, 0), (0, Hp - H)))
    return (pad_w(wih0), pad_w(whh0), pad_b(b0),
            pad_w(wih1), pad_w(whh1), pad_b(b1))


def rnn_forward(x, packed_params, num_timesteps):
    """x: (B, T, H) float32 (batch_first). Returns (B, H)."""
    T_eff = 1 if num_timesteps == 0 else num_timesteps
    if T_eff == 1:
        return x[:, 0, :]

    # Matches PyTorch: the RNN always runs over the full x sequence; T only
    # gates the early-return above.
    B, T, H = x.shape
    wih0, whh0, b0, wih1, whh1, b1 = packed_params
    Hp = wih0.shape[0]
    Bp = _round_up(B, _SUBLANE)

    # Pad activations to the native (sublane, lane) tile and make time the
    # OUTERMOST axis so each in-kernel timestep slice is a whole resident tile.
    # Padded lanes stay exactly zero through the recurrence (zero-padded
    # weights/biases and tanh(0) == 0).
    x_p = jnp.swapaxes(jnp.pad(x, ((0, Bp - B), (0, 0), (0, Hp - H))), 0, 1)

    vmem = lambda: pl.BlockSpec(memory_space=pltpu.MemorySpace.VMEM)

    out = pl.pallas_call(
        _rnn_kernel,
        out_shape=jax.ShapeDtypeStruct((Bp, Hp), x.dtype),
        in_specs=[vmem() for _ in range(7)],
        out_specs=vmem(),
        compiler_params=pltpu.CompilerParams(vmem_limit_bytes=64 << 20),
    )(x_p, wih0, whh0, b0, wih1, whh1, b1)

    return out[:B, :H]


def init_rnn_params(key, H):
    """Deterministic init matching PyTorch nn.RNN's U(-1/sqrt(H), 1/sqrt(H)).
    Weights are stored pre-transposed to (in_features, out_features) so the
    kernel computes x @ W directly."""
    bound = 1.0 / math.sqrt(H)
    ks = jax.random.split(key, 8)
    u = lambda k, shape: jax.random.uniform(k, shape, jnp.float32, -bound, bound)
    wih0 = u(ks[0], (H, H))                 # (in, hidden)
    whh0 = u(ks[1], (H, H))
    b0 = (u(ks[2], (H,)) + u(ks[3], (H,))).reshape(1, H)   # b_ih + b_hh
    wih1 = u(ks[4], (H, H))
    whh1 = u(ks[5], (H, H))
    b1 = (u(ks[6], (H,)) + u(ks[7], (H,))).reshape(1, H)
    return (wih0, whh0, b0, wih1, whh1, b1)


def rnn_reference(x, params):
    """Pure-JAX f32 reference of the same forward (eval mode, no dropout)."""
    wih0, whh0, b0, wih1, whh1, b1 = params
    B, T, H = x.shape
    h0 = jnp.zeros((B, H), jnp.float32)
    h1 = jnp.zeros((B, H), jnp.float32)
    for t in range(T):
        x_t = x[:, t, :]
        h0 = jnp.tanh(x_t @ wih0 + h0 @ whh0 + b0)
        h1 = jnp.tanh(h0 @ wih1 + h1 @ whh1 + b1)
    return h1


if __name__ == "__main__":
    B, T, H = 2, 8, 32         # batch, timesteps, num_input (= hidden_size)
    key = jax.random.PRNGKey(0)
    k_x, k_p = jax.random.split(key)

    x = jax.random.normal(k_x, (B, T, H), dtype=jnp.float32)
    params = init_rnn_params(k_p, H)
    packed = pack_rnn_params(params, H)

    out = rnn_forward(x, packed, num_timesteps=T)
    out = jax.block_until_ready(out)

    ref = rnn_reference(x, params)
    assert out.shape == (B, H)
    # bf16 MXU operands (f32 accumulation) -> loosened tolerance vs f32 ref.
    assert jnp.allclose(out, ref, atol=5e-2, rtol=5e-2), "mismatch vs reference"

    print("KERNEL_OK")
</pallas_src>

<mosaic_0001>
module attributes {stable_mosaic.version = 11 : i64} {
  func.func @_rnn_kernel(%arg0: memref<8x8x128xf32, #tpu.memory_space<vmem>>, %arg1: memref<128x128xbf16, #tpu.memory_space<vmem>>, %arg2: memref<128x128xbf16, #tpu.memory_space<vmem>>, %arg3: memref<1x128xf32, #tpu.memory_space<vmem>>, %arg4: memref<128x128xbf16, #tpu.memory_space<vmem>>, %arg5: memref<128x128xbf16, #tpu.memory_space<vmem>>, %arg6: memref<1x128xf32, #tpu.memory_space<vmem>>, %arg7: memref<8x128xf32, #tpu.memory_space<vmem>>) attributes {dimension_semantics = [], scalar_prefetch = 0 : i64, scratch_operands = 0 : i64, tpu.core_type = #tpu.core_type<tc>} {
    %c0 = arith.constant 0 : index
    %c0_0 = arith.constant 0 : index
    %c0_1 = arith.constant 0 : index
    %0 = vector.load %arg0[%c0, %c0_0, %c0_1] : memref<8x8x128xf32, #tpu.memory_space<vmem>>, vector<8x8x128xf32>
    %1 = arith.truncf %0 : vector<8x8x128xf32> to vector<8x8x128xbf16>
    %2 = vector.shape_cast %1 : vector<8x8x128xbf16> to vector<64x128xbf16>
    %c0_2 = arith.constant 0 : index
    %c0_3 = arith.constant 0 : index
    %3 = vector.load %arg1[%c0_2, %c0_3] : memref<128x128xbf16, #tpu.memory_space<vmem>>, vector<128x128xbf16>
    %cst = arith.constant dense<0.000000e+00> : vector<64x128xf32>
    %4 = tpu.matmul %2, %3, %cst {dimension_numbers = #tpu.dot_dimension_numbers<[1], [0], [0], [1], [0, 0, 1, 1], [], []>} : vector<64x128xbf16>, vector<128x128xbf16>, vector<64x128xf32> -> vector<64x128xf32>
    %c0_4 = arith.constant 0 : index
    %c0_5 = arith.constant 0 : index
    %5 = vector.load %arg3[%c0_4, %c0_5] : memref<1x128xf32, #tpu.memory_space<vmem>>, vector<1x128xf32>
    %6 = vector.broadcast %5 : vector<1x128xf32> to vector<64x128xf32>
    %7 = arith.addf %4, %6 : vector<64x128xf32>
    %8 = vector.shape_cast %7 : vector<64x128xf32> to vector<8x8x128xf32>
    %c0_6 = arith.constant 0 : index
    %c0_7 = arith.constant 0 : index
    %9 = vector.load %arg2[%c0_6, %c0_7] : memref<128x128xbf16, #tpu.memory_space<vmem>>, vector<128x128xbf16>
    %c0_8 = arith.constant 0 : index
    %c0_9 = arith.constant 0 : index
    %10 = vector.load %arg4[%c0_8, %c0_9] : memref<128x128xbf16, #tpu.memory_space<vmem>>, vector<128x128xbf16>
    %c0_10 = arith.constant 0 : index
    %c0_11 = arith.constant 0 : index
    %11 = vector.load %arg5[%c0_10, %c0_11] : memref<128x128xbf16, #tpu.memory_space<vmem>>, vector<128x128xbf16>
    %c0_12 = arith.constant 0 : index
    %c0_13 = arith.constant 0 : index
    %12 = vector.load %arg6[%c0_12, %c0_13] : memref<1x128xf32, #tpu.memory_space<vmem>>, vector<1x128xf32>
    %13 = vector.shape_cast %12 : vector<1x128xf32> to vector<1x128xf32>
    %14 = vector.broadcast %13 : vector<1x128xf32> to vector<8x128xf32>
    %cst_14 = arith.constant 0.000000e+00 : f32
    %15 = vector.broadcast %cst_14 : f32 to vector<8x128xf32>
    %cst_15 = arith.constant 0.000000e+00 : f32
    %16 = vector.broadcast %cst_15 : f32 to vector<8x128xf32>
    %17 = arith.truncf %16 : vector<8x128xf32> to vector<8x128xbf16>
    %cst_16 = arith.constant dense<0.000000e+00> : vector<8x128xf32>
    %18 = tpu.matmul %17, %11, %cst_16 {dimension_numbers = #tpu.dot_dimension_numbers<[1], [0], [0], [1], [0, 0, 1, 1], [], []>} : vector<8x128xbf16>, vector<128x128xbf16>, vector<8x128xf32> -> vector<8x128xf32>
    %19 = vector.extract_strided_slice %8 {offsets = [0, 0, 0], sizes = [1, 8, 128], strides = [1, 1, 1]} : vector<8x8x128xf32> to vector<1x8x128xf32>
    %20 = vector.shape_cast %19 : vector<1x8x128xf32> to vector<8x128xf32>
    %21 = arith.truncf %15 : vector<8x128xf32> to vector<8x128xbf16>
    %cst_17 = arith.constant dense<0.000000e+00> : vector<8x128xf32>
    %22 = tpu.matmul %21, %9, %cst_17 {dimension_numbers = #tpu.dot_dimension_numbers<[1], [0], [0], [1], [0, 0, 1, 1], [], []>} : vector<8x128xbf16>, vector<128x128xbf16>, vector<8x128xf32> -> vector<8x128xf32>
    %23 = arith.addf %20, %22 : vector<8x128xf32>
    %24 = math.tanh %23 : vector<8x128xf32>
    %25 = arith.truncf %24 : vector<8x128xf32> to vector<8x128xbf16>
    %cst_18 = arith.constant dense<0.000000e+00> : vector<8x128xf32>
    %26 = tpu.matmul %25, %10, %cst_18 {dimension_numbers = #tpu.dot_dimension_numbers<[1], [0], [0], [1], [0, 0, 1, 1], [], []>} : vector<8x128xbf16>, vector<128x128xbf16>, vector<8x128xf32> -> vector<8x128xf32>
    %27 = arith.addf %26, %18 : vector<8x128xf32>
    %28 = arith.addf %27, %14 : vector<8x128xf32>
    %29 = math.tanh %28 : vector<8x128xf32>
    %30 = arith.truncf %29 : vector<8x128xf32> to vector<8x128xbf16>
    %cst_19 = arith.constant dense<0.000000e+00> : vector<8x128xf32>
    %31 = tpu.matmul %30, %11, %cst_19 {dimension_numbers = #tpu.dot_dimension_numbers<[1], [0], [0], [1], [0, 0, 1, 1], [], []>} : vector<8x128xbf16>, vector<128x128xbf16>, vector<8x128xf32> -> vector<8x128xf32>
    %32 = vector.extract_strided_slice %8 {offsets = [1, 0, 0], sizes = [1, 8, 128], strides = [1, 1, 1]} : vector<8x8x128xf32> to vector<1x8x128xf32>
    %33 = vector.shape_cast %32 : vector<1x8x128xf32> to vector<8x128xf32>
    %34 = arith.truncf %24 : vector<8x128xf32> to vector<8x128xbf16>
    %cst_20 = arith.constant dense<0.000000e+00> : vector<8x128xf32>
    %35 = tpu.matmul %34, %9, %cst_20 {dimension_numbers = #tpu.dot_dimension_numbers<[1], [0], [0], [1], [0, 0, 1, 1], [], []>} : vector<8x128xbf16>, vector<128x128xbf16>, vector<8x128xf32> -> vector<8x128xf32>
    %36 = arith.addf %33, %35 : vector<8x128xf32>
    %37 = math.tanh %36 : vector<8x128xf32>
    %38 = arith.truncf %37 : vector<8x128xf32> to vector<8x128xbf16>
    %cst_21 = arith.constant dense<0.000000e+00> : vector<8x128xf32>
    %39 = tpu.matmul %38, %10, %cst_21 {dimension_numbers = #tpu.dot_dimension_numbers<[1], [0], [0], [1], [0, 0, 1, 1], [], []>} : vector<8x128xbf16>, vector<128x128xbf16>, vector<8x128xf32> -> vector<8x128xf32>
    %40 = arith.addf %39, %31 : vector<8x128xf32>
    %41 = arith.addf %40, %14 : vector<8x128xf32>
    %42 = math.tanh %41 : vector<8x128xf32>
    %43 = arith.truncf %42 : vector<8x128xf32> to vector<8x128xbf16>
    %cst_22 = arith.constant dense<0.000000e+00> : vector<8x128xf32>
    %44 = tpu.matmul %43, %11, %cst_22 {dimension_numbers = #tpu.dot_dimension_numbers<[1], [0], [0], [1], [0, 0, 1, 1], [], []>} : vector<8x128xbf16>, vector<128x128xbf16>, vector<8x128xf32> -> vector<8x128xf32>
    %45 = vector.extract_strided_slice %8 {offsets = [2, 0, 0], sizes = [1, 8, 128], strides = [1, 1, 1]} : vector<8x8x128xf32> to vector<1x8x128xf32>
    %46 = vector.shape_cast %45 : vector<1x8x128xf32> to vector<8x128xf32>
    %47 = arith.truncf %37 : vector<8x128xf32> to vector<8x128xbf16>
    %cst_23 = arith.constant dense<0.000000e+00> : vector<8x128xf32>
    %48 = tpu.matmul %47, %9, %cst_23 {dimension_numbers = #tpu.dot_dimension_numbers<[1], [0], [0], [1], [0, 0, 1, 1], [], []>} : vector<8x128xbf16>, vector<128x128xbf16>, vector<8x128xf32> -> vector<8x128xf32>
    %49 = arith.addf %46, %48 : vector<8x128xf32>
    %50 = math.tanh %49 : vector<8x128xf32>
    %51 = arith.truncf %50 : vector<8x128xf32> to vector<8x128xbf16>
    %cst_24 = arith.constant dense<0.000000e+00> : vector<8x128xf32>
    %52 = tpu.matmul %51, %10, %cst_24 {dimension_numbers = #tpu.dot_dimension_numbers<[1], [0], [0], [1], [0, 0, 1, 1], [], []>} : vector<8x128xbf16>, vector<128x128xbf16>, vector<8x128xf32> -> vector<8x128xf32>
    %53 = arith.addf %52, %44 : vector<8x128xf32>
    %54 = arith.addf %53, %14 : vector<8x128xf32>
    %55 = math.tanh %54 : vector<8x128xf32>
    %56 = arith.truncf %55 : vector<8x128xf32> to vector<8x128xbf16>
    %cst_25 = arith.constant dense<0.000000e+00> : vector<8x128xf32>
    %57 = tpu.matmul %56, %11, %cst_25 {dimension_numbers = #tpu.dot_dimension_numbers<[1], [0], [0], [1], [0, 0, 1, 1], [], []>} : vector<8x128xbf16>, vector<128x128xbf16>, vector<8x128xf32> -> vector<8x128xf32>
    %58 = vector.extract_strided_slice %8 {offsets = [3, 0, 0], sizes = [1, 8, 128], strides = [1, 1, 1]} : vector<8x8x128xf32> to vector<1x8x128xf32>
    %59 = vector.shape_cast %58 : vector<1x8x128xf32> to vector<8x128xf32>
    %60 = arith.truncf %50 : vector<8x128xf32> to vector<8x128xbf16>
    %cst_26 = arith.constant dense<0.000000e+00> : vector<8x128xf32>
    %61 = tpu.matmul %60, %9, %cst_26 {dimension_numbers = #tpu.dot_dimension_numbers<[1], [0], [0], [1], [0, 0, 1, 1], [], []>} : vector<8x128xbf16>, vector<128x128xbf16>, vector<8x128xf32> -> vector<8x128xf32>
    %62 = arith.addf %59, %61 : vector<8x128xf32>
    %63 = math.tanh %62 : vector<8x128xf32>
    %64 = arith.truncf %63 : vector<8x128xf32> to vector<8x128xbf16>
    %cst_27 = arith.constant dense<0.000000e+00> : vector<8x128xf32>
    %65 = tpu.matmul %64, %10, %cst_27 {dimension_numbers = #tpu.dot_dimension_numbers<[1], [0], [0], [1], [0, 0, 1, 1], [], []>} : vector<8x128xbf16>, vector<128x128xbf16>, vector<8x128xf32> -> vector<8x128xf32>
    %66 = arith.addf %65, %57 : vector<8x128xf32>
    %67 = arith.addf %66, %14 : vector<8x128xf32>
    %68 = math.tanh %67 : vector<8x128xf32>
    %69 = arith.truncf %68 : vector<8x128xf32> to vector<8x128xbf16>
    %cst_28 = arith.constant dense<0.000000e+00> : vector<8x128xf32>
    %70 = tpu.matmul %69, %11, %cst_28 {dimension_numbers = #tpu.dot_dimension_numbers<[1], [0], [0], [1], [0, 0, 1, 1], [], []>} : vector<8x128xbf16>, vector<128x128xbf16>, vector<8x128xf32> -> vector<8x128xf32>
    %71 = vector.extract_strided_slice %8 {offsets = [4, 0, 0], sizes = [1, 8, 128], strides = [1, 1, 1]} : vector<8x8x128xf32> to vector<1x8x128xf32>
    %72 = vector.shape_cast %71 : vector<1x8x128xf32> to vector<8x128xf32>
    %73 = arith.truncf %63 : vector<8x128xf32> to vector<8x128xbf16>
    %cst_29 = arith.constant dense<0.000000e+00> : vector<8x128xf32>
    %74 = tpu.matmul %73, %9, %cst_29 {dimension_numbers = #tpu.dot_dimension_numbers<[1], [0], [0], [1], [0, 0, 1, 1], [], []>} : vector<8x128xbf16>, vector<128x128xbf16>, vector<8x128xf32> -> vector<8x128xf32>
    %75 = arith.addf %72, %74 : vector<8x128xf32>
    %76 = math.tanh %75 : vector<8x128xf32>
    %77 = arith.truncf %76 : vector<8x128xf32> to vector<8x128xbf16>
    %cst_30 = arith.constant dense<0.000000e+00> : vector<8x128xf32>
    %78 = tpu.matmul %77, %10, %cst_30 {dimension_numbers = #tpu.dot_dimension_numbers<[1], [0], [0], [1], [0, 0, 1, 1], [], []>} : vector<8x128xbf16>, vector<128x128xbf16>, vector<8x128xf32> -> vector<8x128xf32>
    %79 = arith.addf %78, %70 : vector<8x128xf32>
    %80 = arith.addf %79, %14 : vector<8x128xf32>
    %81 = math.tanh %80 : vector<8x128xf32>
    %82 = arith.truncf %81 : vector<8x128xf32> to vector<8x128xbf16>
    %cst_31 = arith.constant dense<0.000000e+00> : vector<8x128xf32>
    %83 = tpu.matmul %82, %11, %cst_31 {dimension_numbers = #tpu.dot_dimension_numbers<[1], [0], [0], [1], [0, 0, 1, 1], [], []>} : vector<8x128xbf16>, vector<128x128xbf16>, vector<8x128xf32> -> vector<8x128xf32>
    %84 = vector.extract_strided_slice %8 {offsets = [5, 0, 0], sizes = [1, 8, 128], strides = [1, 1, 1]} : vector<8x8x128xf32> to vector<1x8x128xf32>
    %85 = vector.shape_cast %84 : vector<1x8x128xf32> to vector<8x128xf32>
    %86 = arith.truncf %76 : vector<8x128xf32> to vector<8x128xbf16>
    %cst_32 = arith.constant dense<0.000000e+00> : vector<8x128xf32>
    %87 = tpu.matmul %86, %9, %cst_32 {dimension_numbers = #tpu.dot_dimension_numbers<[1], [0], [0], [1], [0, 0, 1, 1], [], []>} : vector<8x128xbf16>, vector<128x128xbf16>, vector<8x128xf32> -> vector<8x128xf32>
    %88 = arith.addf %85, %87 : vector<8x128xf32>
    %89 = math.tanh %88 : vector<8x128xf32>
    %90 = arith.truncf %89 : vector<8x128xf32> to vector<8x128xbf16>
    %cst_33 = arith.constant dense<0.000000e+00> : vector<8x128xf32>
    %91 = tpu.matmul %90, %10, %cst_33 {dimension_numbers = #tpu.dot_dimension_numbers<[1], [0], [0], [1], [0, 0, 1, 1], [], []>} : vector<8x128xbf16>, vector<128x128xbf16>, vector<8x128xf32> -> vector<8x128xf32>
    %92 = arith.addf %91, %83 : vector<8x128xf32>
    %93 = arith.addf %92, %14 : vector<8x128xf32>
    %94 = math.tanh %93 : vector<8x128xf32>
    %95 = arith.truncf %94 : vector<8x128xf32> to vector<8x128xbf16>
    %cst_34 = arith.constant dense<0.000000e+00> : vector<8x128xf32>
    %96 = tpu.matmul %95, %11, %cst_34 {dimension_numbers = #tpu.dot_dimension_numbers<[1], [0], [0], [1], [0, 0, 1, 1], [], []>} : vector<8x128xbf16>, vector<128x128xbf16>, vector<8x128xf32> -> vector<8x128xf32>
    %97 = vector.extract_strided_slice %8 {offsets = [6, 0, 0], sizes = [1, 8, 128], strides = [1, 1, 1]} : vector<8x8x128xf32> to vector<1x8x128xf32>
    %98 = vector.shape_cast %97 : vector<1x8x128xf32> to vector<8x128xf32>
    %99 = arith.truncf %89 : vector<8x128xf32> to vector<8x128xbf16>
    %cst_35 = arith.constant dense<0.000000e+00> : vector<8x128xf32>
    %100 = tpu.matmul %99, %9, %cst_35 {dimension_numbers = #tpu.dot_dimension_numbers<[1], [0], [0], [1], [0, 0, 1, 1], [], []>} : vector<8x128xbf16>, vector<128x128xbf16>, vector<8x128xf32> -> vector<8x128xf32>
    %101 = arith.addf %98, %100 : vector<8x128xf32>
    %102 = math.tanh %101 : vector<8x128xf32>
    %103 = arith.truncf %102 : vector<8x128xf32> to vector<8x128xbf16>
    %cst_36 = arith.constant dense<0.000000e+00> : vector<8x128xf32>
    %104 = tpu.matmul %103, %10, %cst_36 {dimension_numbers = #tpu.dot_dimension_numbers<[1], [0], [0], [1], [0, 0, 1, 1], [], []>} : vector<8x128xbf16>, vector<128x128xbf16>, vector<8x128xf32> -> vector<8x128xf32>
    %105 = arith.addf %104, %96 : vector<8x128xf32>
    %106 = arith.addf %105, %14 : vector<8x128xf32>
    %107 = math.tanh %106 : vector<8x128xf32>
    %108 = arith.truncf %107 : vector<8x128xf32> to vector<8x128xbf16>
    %cst_37 = arith.constant dense<0.000000e+00> : vector<8x128xf32>
    %109 = tpu.matmul %108, %11, %cst_37 {dimension_numbers = #tpu.dot_dimension_numbers<[1], [0], [0], [1], [0, 0, 1, 1], [], []>} : vector<8x128xbf16>, vector<128x128xbf16>, vector<8x128xf32> -> vector<8x128xf32>
    %110 = vector.extract_strided_slice %8 {offsets = [7, 0, 0], sizes = [1, 8, 128], strides = [1, 1, 1]} : vector<8x8x128xf32> to vector<1x8x128xf32>
    %111 = vector.shape_cast %110 : vector<1x8x128xf32> to vector<8x128xf32>
    %112 = arith.truncf %102 : vector<8x128xf32> to vector<8x128xbf16>
    %cst_38 = arith.constant dense<0.000000e+00> : vector<8x128xf32>
    %113 = tpu.matmul %112, %9, %cst_38 {dimension_numbers = #tpu.dot_dimension_numbers<[1], [0], [0], [1], [0, 0, 1, 1], [], []>} : vector<8x128xbf16>, vector<128x128xbf16>, vector<8x128xf32> -> vector<8x128xf32>
    %114 = arith.addf %111, %113 : vector<8x128xf32>
    %115 = math.tanh %114 : vector<8x128xf32>
    %116 = arith.truncf %115 : vector<8x128xf32> to vector<8x128xbf16>
    %cst_39 = arith.constant dense<0.000000e+00> : vector<8x128xf32>
    %117 = tpu.matmul %116, %10, %cst_39 {dimension_numbers = #tpu.dot_dimension_numbers<[1], [0], [0], [1], [0, 0, 1, 1], [], []>} : vector<8x128xbf16>, vector<128x128xbf16>, vector<8x128xf32> -> vector<8x128xf32>
    %118 = arith.addf %117, %109 : vector<8x128xf32>
    %119 = arith.addf %118, %14 : vector<8x128xf32>
    %120 = math.tanh %119 : vector<8x128xf32>
    %c0_40 = arith.constant 0 : index
    %c0_41 = arith.constant 0 : index
    %121 = vector.load %arg7[%c0_40, %c0_41] : memref<8x128xf32, #tpu.memory_space<vmem>>, vector<8x128xf32>
    tpu.vector_store %arg7[%c0_40, %c0_41], %120 {strides = array<i32>} : memref<8x128xf32, #tpu.memory_space<vmem>>, vector<8x128xf32>,
    return
  }
}

</mosaic_0001>

<llo_original>
// kernel: tpu_custom_call.1
$region0: #{tpu_custom_call.1}
  #allocation0 [shape = 'u32[]', space=smem, size = 0x4, offset = 0x4, fixed_abs, tag = 'smem constant byte address 0x4 - core index']
  #allocation1 [shape = 'u32[144,128]{1,0:T(1,128)}', space=vmem, size = 0x12000, scoped, tag = 'internal scratch']
  %s0 = inlined_call_operand.hbm [shape: f32[8,8,128], index: 0, kind: input, shape index: {}]
  %s1 = inlined_call_operand.hbm [shape: bf16[128,128], index: 1, kind: input, shape index: {}]
  %s2 = inlined_call_operand.hbm [shape: bf16[128,128], index: 2, kind: input, shape index: {}]
  %s3 = inlined_call_operand.hbm [shape: f32[1,128], index: 3, kind: input, shape index: {}]
  %s4 = inlined_call_operand.hbm [shape: bf16[128,128], index: 4, kind: input, shape index: {}]
  %s5 = inlined_call_operand.hbm [shape: bf16[128,128], index: 5, kind: input, shape index: {}]
  %s6 = inlined_call_operand.hbm [shape: f32[1,128], index: 6, kind: input, shape index: {}]
  %s7 = inlined_call_operand.hbm [shape: f32[8,128], index: 7, kind: output, shape index: {}]
  %s8 = sld [smem:[#allocation0]]
  $region66: #{tpu_custom_call.1} parent=0
    _
  %s10 = ssub.s32 1, %s8
  %s11 = scalar_select 0, %s10, %s8
  $region1: #{tpu_custom_call.1} parent=0
    #allocation2 [shape = 'u8[32768]{0}', space=vmem, size = 0x8000, scoped, tag = 'input window, operand 0, single buffered']
    #allocation3 [shape = 's32[1]{0}', space=sflag, size = 0x4, scoped, tag = 'scoped memory for tpu_custom_call.1']
    #allocation4 [shape = 's32[1]{0}', space=sflag, size = 0x4, scoped, tag = 'scoped memory for tpu_custom_call.1']
    #allocation5 [shape = 'u8[32768]{0}', space=vmem, size = 0x8000, scoped, tag = 'input window, operand 1, single buffered']
    #allocation6 [shape = 's32[1]{0}', space=sflag, size = 0x4, scoped, tag = 'scoped memory for tpu_custom_call.1']
    #allocation7 [shape = 'u8[32768]{0}', space=vmem, size = 0x8000, scoped, tag = 'input window, operand 2, single buffered']
    #allocation8 [shape = 'u8[512]{0}', space=vmem, size = 0x400, scoped, tag = 'input window, operand 3, single buffered']
    #allocation9 [shape = 's32[1]{0}', space=sflag, size = 0x4, scoped, tag = 'scoped memory for tpu_custom_call.1']
    #allocation10 [shape = 'u8[32768]{0}', space=vmem, size = 0x8000, scoped, tag = 'input window, operand 4, single buffered']
    #allocation11 [shape = 'u8[32768]{0}', space=vmem, size = 0x8000, scoped, tag = 'input window, operand 5, single buffered']
    #allocation12 [shape = 's32[1]{0}', space=sflag, size = 0x4, scoped, tag = 'scoped memory for tpu_custom_call.1']
    #allocation13 [shape = 'u8[512]{0}', space=vmem, size = 0x400, scoped, tag = 'input window, operand 6, single buffered']
    #allocation14 [shape = 'u8[4096]{0}', space=vmem, size = 0x1000, scoped, tag = 'output window, operand 0, single buffered']
    %12 = vsyncpa [#allocation3], 0
    %13 = vsyncpa [#allocation6], 0
    %14 = vsyncpa [#allocation9], 0
    %15 = vsyncpa [#allocation12], 0
    %16 = vsyncpa [#allocation4], 0
    // Predicated region
    $region2: #{tpu_custom_call.1} parent=1 // pred_check
      _
    $region3: #{tpu_custom_call.1} parent=1 // pred_check_branch
      %18 = sbr.rel (0) target = $region5
    $region4: #{tpu_custom_call.1} parent=1 // pred_region
      %s20 = ssub.s32 1024, 1024
      %21 = vsyncadd [#allocation3], %s20
      %s22 = sshll.u32 [#allocation2], 4
      %s23 = int_to_ptr.vmem [resolvable:$true] %s22
      %28 = dma.hbm_to_vmem [thread:$0]  %s0, 1024, %s23, [#allocation3], 128, 128, 8
    $region5: #{tpu_custom_call.1} parent=1 // pred_fallthru
      _
    // Predicated region
    $region6: #{tpu_custom_call.1} parent=1 // pred_check
      _
    $region7: #{tpu_custom_call.1} parent=1 // pred_check_branch
      %30 = sbr.rel (0) target = $region9
    $region8: #{tpu_custom_call.1} parent=1 // pred_region
      %s32 = ssub.s32 1024, 1024
      %33 = vsyncadd [#allocation6], %s32
      %s34 = sshll.u32 [#allocation5], 4
      %s35 = int_to_ptr.vmem [resolvable:$true] %s34
      %40 = dma.hbm_to_vmem [thread:$0]  %s1, 1024, %s35, [#allocation6], 64, 64, 4
    $region9: #{tpu_custom_call.1} parent=1 // pred_fallthru
      _
    // Predicated region
    $region10: #{tpu_custom_call.1} parent=1 // pred_check
      _
    $region11: #{tpu_custom_call.1} parent=1 // pred_check_branch
      %42 = sbr.rel (0) target = $region13
    $region12: #{tpu_custom_call.1} parent=1 // pred_region
      %s44 = ssub.s32 1024, 1024
      %45 = vsyncadd [#allocation6], %s44
      %s46 = sshll.u32 [#allocation7], 4
      %s47 = int_to_ptr.vmem [resolvable:$true] %s46
      %52 = dma.hbm_to_vmem [thread:$0]  %s2, 1024, %s47, [#allocation6], 64, 64, 4
    $region13: #{tpu_custom_call.1} parent=1 // pred_fallthru
      _
    // Predicated region
    $region14: #{tpu_custom_call.1} parent=1 // pred_check
      _
    $region15: #{tpu_custom_call.1} parent=1 // pred_check_branch
      %54 = sbr.rel (0) target = $region17
    $region16: #{tpu_custom_call.1} parent=1 // pred_region
      %s56 = ssub.s32 16, 16
      %57 = vsyncadd [#allocation9], %s56
      %s59 = sshll.u32 [#allocation8], 4
      %s60 = int_to_ptr.vmem [resolvable:$true] %s59
      %62 = dma.hbm_to_vmem [thread:$0]  %s3, 16, %s60, [#allocation9]
    $region17: #{tpu_custom_call.1} parent=1 // pred_fallthru
      _
    // Predicated region
    $region18: #{tpu_custom_call.1} parent=1 // pred_check
      _
    $region19: #{tpu_custom_call.1} parent=1 // pred_check_branch
      %64 = sbr.rel (0) target = $region21
    $region20: #{tpu_custom_call.1} parent=1 // pred_region
      %s66 = ssub.s32 1024, 1024
      %67 = vsyncadd [#allocation9], %s66
      %s68 = sshll.u32 [#allocation10], 4
      %s69 = int_to_ptr.vmem [resolvable:$true] %s68
      %74 = dma.hbm_to_vmem [thread:$0]  %s4, 1024, %s69, [#allocation9], 64, 64, 4
    $region21: #{tpu_custom_call.1} parent=1 // pred_fallthru
      _
    // Predicated region
    $region22: #{tpu_custom_call.1} parent=1 // pred_check
      _
    $region23: #{tpu_custom_call.1} parent=1 // pred_check_branch
      %76 = sbr.rel (0) target = $region25
    $region24: #{tpu_custom_call.1} parent=1 // pred_region
      %s78 = ssub.s32 1024, 1024
      %79 = vsyncadd [#allocation12], %s78
      %s80 = sshll.u32 [#allocation11], 4
      %s81 = int_to_ptr.vmem [resolvable:$true] %s80
      %86 = dma.hbm_to_vmem [thread:$0]  %s5, 1024, %s81, [#allocation12], 64, 64, 4
    $region25: #{tpu_custom_call.1} parent=1 // pred_fallthru
      _
    // Predicated region
    $region26: #{tpu_custom_call.1} parent=1 // pred_check
      _
    $region27: #{tpu_custom_call.1} parent=1 // pred_check_branch
      %88 = sbr.rel (0) target = $region29
    $region28: #{tpu_custom_call.1} parent=1 // pred_region
      %s90 = ssub.s32 16, 16
      %91 = vsyncadd [#allocation12], %s90
      %s93 = sshll.u32 [#allocation13], 4
      %s94 = int_to_ptr.vmem [resolvable:$true] %s93
      %96 = dma.hbm_to_vmem [thread:$0]  %s6, 16, %s94, [#allocation12]
    $region29: #{tpu_custom_call.1} parent=1 // pred_fallthru
      _
    // Predicated region
    $region30: #{tpu_custom_call.1} parent=1 // pred_check
      _
    $region31: #{tpu_custom_call.1} parent=1 // pred_check_branch
      %98 = sbr.rel (0) target = $region33
    $region32: #{tpu_custom_call.1} parent=1 // pred_region
      %99 = dma.done [#allocation3], 1024
    $region33: #{tpu_custom_call.1} parent=1 // pred_fallthru
      _
    // Predicated region
    $region34: #{tpu_custom_call.1} parent=1 // pred_check
      _
    $region35: #{tpu_custom_call.1} parent=1 // pred_check_branch
      %101 = sbr.rel (0) target = $region37
    $region36: #{tpu_custom_call.1} parent=1 // pred_region
      %102 = dma.done [#allocation6], 1024
    $region37: #{tpu_custom_call.1} parent=1 // pred_fallthru
      _
    // Predicated region
    $region38: #{tpu_custom_call.1} parent=1 // pred_check
      _
    $region39: #{tpu_custom_call.1} parent=1 // pred_check_branch
      %104 = sbr.rel (0) target = $region41
    $region40: #{tpu_custom_call.1} parent=1 // pred_region
      %105 = dma.done [#allocation6], 1024
    $region41: #{tpu_custom_call.1} parent=1 // pred_fallthru
      _
    // Predicated region
    $region42: #{tpu_custom_call.1} parent=1 // pred_check
      _
    $region43: #{tpu_custom_call.1} parent=1 // pred_check_branch
      %107 = sbr.rel (0) target = $region45
    $region44: #{tpu_custom_call.1} parent=1 // pred_region
      %108 = dma.done [#allocation9], 16
    $region45: #{tpu_custom_call.1} parent=1 // pred_fallthru
      _
    // Predicated region
    $region46: #{tpu_custom_call.1} parent=1 // pred_check
      _
    $region47: #{tpu_custom_call.1} parent=1 // pred_check_branch
      %110 = sbr.rel (0) target = $region49
    $region48: #{tpu_custom_call.1} parent=1 // pred_region
      %111 = dma.done [#allocation9], 1024
    $region49: #{tpu_custom_call.1} parent=1 // pred_fallthru
      _
    // Predicated region
    $region50: #{tpu_custom_call.1} parent=1 // pred_check
      _
    $region51: #{tpu_custom_call.1} parent=1 // pred_check_branch
      %113 = sbr.rel (0) target = $region53
    $region52: #{tpu_custom_call.1} parent=1 // pred_region
      %114 = dma.done [#allocation12], 1024
    $region53: #{tpu_custom_call.1} parent=1 // pred_fallthru
      _
    // Predicated region
    $region54: #{tpu_custom_call.1} parent=1 // pred_check
      _
    $region55: #{tpu_custom_call.1} parent=1 // pred_check_branch
      %116 = sbr.rel (0) target = $region57
    $region56: #{tpu_custom_call.1} parent=1 // pred_region
      %117 = dma.done [#allocation12], 16
    $region57: #{tpu_custom_call.1} parent=1 // pred_fallthru
      _
    %v119 = vld [vmem:[#allocation2] sm:$0xff]
    %v120 = vld [vmem:[#allocation2 + $0x8] sm:$0xff]
    %v121 = vld [vmem:[#allocation2 + $0x10] sm:$0xff]
    %v122 = vld [vmem:[#allocation2 + $0x18] sm:$0xff]
    %v123 = vld [vmem:[#allocation2 + $0x20] sm:$0xff]
    %v124 = vld [vmem:[#allocation2 + $0x28] sm:$0xff]
    %v125 = vld [vmem:[#allocation2 + $0x30] sm:$0xff]
    %v126 = vld [vmem:[#allocation2 + $0x38] sm:$0xff]
    %v127 = vpack.c.bf16 %v119, %v119
    %v128 = vpack.c.bf16 %v120, %v120
    %v129 = vpack.c.bf16 %v121, %v121
    %v130 = vpack.c.bf16 %v122, %v122
    %v131 = vpack.c.bf16 %v123, %v123
    %v132 = vpack.c.bf16 %v124, %v124
    %v133 = vpack.c.bf16 %v125, %v125
    %v134 = vpack.c.bf16 %v126, %v126
    %v135 = vld [vmem:[#allocation5] sm:$0xf]
    %v136 = vld [vmem:[#allocation5 + $0x4] sm:$0xf]
    %v137 = vld [vmem:[#allocation5 + $0x8] sm:$0xf]
    %v138 = vld [vmem:[#allocation5 + $0xc] sm:$0xf]
    %v139 = vld [vmem:[#allocation5 + $0x10] sm:$0xf]
    %v140 = vld [vmem:[#allocation5 + $0x14] sm:$0xf]
    %v141 = vld [vmem:[#allocation5 + $0x18] sm:$0xf]
    %v142 = vld [vmem:[#allocation5 + $0x1c] sm:$0xf]
    %v143 = vld [vmem:[#allocation5 + $0x20] sm:$0xf]
    %v144 = vld [vmem:[#allocation5 + $0x24] sm:$0xf]
    %v145 = vld [vmem:[#allocation5 + $0x28] sm:$0xf]
    %v146 = vld [vmem:[#allocation5 + $0x2c] sm:$0xf]
    %v147 = vld [vmem:[#allocation5 + $0x30] sm:$0xf]
    %v148 = vld [vmem:[#allocation5 + $0x34] sm:$0xf]
    %v149 = vld [vmem:[#allocation5 + $0x38] sm:$0xf]
    %v150 = vld [vmem:[#allocation5 + $0x3c] sm:$0xf]
    %v151 = vld [vmem:[#allocation8] sm:$0x1]
    %v153 = vlaneseq
    %v154 = vshrl.u32 %v153, 7
    %v155 = vsub.s32 0, %v154
    %v156 = vrot.slane %v151, %v155
    %v166 = vunpack.c.l.b16 %v127
    %v167 = vunpack.c.l.b16 %v128
    %v168 = vunpack.c.l.b16 %v129
    %v169 = vunpack.c.l.b16 %v130
    %v170 = vunpack.c.l.b16 %v131
    %v171 = vunpack.c.l.b16 %v132
    %v172 = vunpack.c.l.b16 %v133
    %v173 = vunpack.c.l.b16 %v134
    %v174 = vpack.c.b16 %v167, %v166
    %v175 = vpack.c.b16 %v169, %v168
    %v176 = vpack.c.b16 %v171, %v170
    %v177 = vpack.c.b16 %v173, %v172
    %v198 = vunpack.c.l.b16 %v135
    %v199 = vunpack.c.l.b16 %v136
    %v200 = vunpack.c.l.b16 %v137
    %v201 = vunpack.c.l.b16 %v138
    %v202 = vunpack.c.l.b16 %v139
    %v203 = vunpack.c.l.b16 %v140
    %v204 = vunpack.c.l.b16 %v141
    %v205 = vunpack.c.l.b16 %v142
    %v206 = vunpack.c.l.b16 %v143
    %v207 = vunpack.c.l.b16 %v144
    %v208 = vunpack.c.l.b16 %v145
    %v209 = vunpack.c.l.b16 %v146
    %v210 = vunpack.c.l.b16 %v147
    %v211 = vunpack.c.l.b16 %v148
    %v212 = vunpack.c.l.b16 %v149
    %v213 = vunpack.c.l.b16 %v150
    %v214 = vpack.c.b16 %v199, %v198
    %v215 = vpack.c.b16 %v201, %v200
    %v216 = vpack.c.b16 %v203, %v202
    %v217 = vpack.c.b16 %v205, %v204
    %v218 = vpack.c.b16 %v207, %v206
    %v219 = vpack.c.b16 %v209, %v208
    %v220 = vpack.c.b16 %v211, %v210
    %v221 = vpack.c.b16 %v213, %v212
    %230 = vmatprep.subr.bf16.mxu0 0
    %231 = vmatpush1.bf16.msra.mxu0 %v214
    %232 = vmatprep.subr.bf16.mxu0 0
    %233 = vmatpush1.bf16.msra.mxu0 %v215
    %234 = vmatprep.subr.bf16.mxu0 0
    %235 = vmatpush1.bf16.msra.mxu0 %v216
    %236 = vmatprep.subr.bf16.mxu0 0
    %237 = vmatpush1.bf16.msra.mxu0 %v217
    %238 = vmatprep.subr.bf16.mxu0 0
    %239 = vmatpush1.bf16.msra.mxu0 %v218
    %240 = vmatprep.subr.bf16.mxu0 0
    %241 = vmatpush1.bf16.msra.mxu0 %v219
    %242 = vmatprep.subr.bf16.mxu0 0
    %243 = vmatpush1.bf16.msra.mxu0 %v220
    %244 = vmatprep.subr.bf16.mxu0 0
    %245 = vmatpush1.bf16.msra.mxu0 %v221
    %246 = vmatprep.subr.bf16.mxu0 0
    %247 = vmatpush1.bf16.msra.mxu0 0
    %248 = vmatprep.subr.bf16.mxu0 0
    %249 = vmatpush1.bf16.msra.mxu0 0
    %250 = vmatprep.subr.bf16.mxu0 0
    %251 = vmatpush1.bf16.msra.mxu0 0
    %252 = vmatprep.subr.bf16.mxu0 0
    %253 = vmatpush1.bf16.msra.mxu0 0
    %254 = vmatprep.subr.bf16.mxu0 0
    %255 = vmatpush1.bf16.msra.mxu0 0
    %256 = vmatprep.subr.bf16.mxu0 0
    %257 = vmatpush1.bf16.msra.mxu0 0
    %258 = vmatprep.subr.bf16.mxu0 0
    %259 = vmatpush1.bf16.msra.mxu0 0
    %260 = vmatprep.subr.bf16.mxu0 0
    %261 = vmatpush1.bf16.msra.mxu0 0
    %262 = vmatprep.mubr.bf16.mxu0 0
    %263 = vmatmul.mubr.bf16.gmra.mrb[0].mxu0 %v174
    %v264 = vpop.f32.mrb[0].mxu0
    %v265 = vadd.f32 %v156, %v264
    %v266 = vpop.f32.mrb[0].mxu0
    %v267 = vpop.f32.mrb[0].mxu0
    %v268 = vadd.f32 %v156, %v267
    %v269 = vpop.f32.mrb[0].mxu0
    %270 = vmatprep.mubr.bf16.mxu0 0
    %271 = vmatmul.mubr.bf16.gmra.mrb[0].mxu0 %v175
    %v272 = vpop.f32.mrb[0].mxu0
    %v273 = vadd.f32 %v156, %v272
    %v274 = vpop.f32.mrb[0].mxu0
    %v275 = vpop.f32.mrb[0].mxu0
    %v276 = vadd.f32 %v156, %v275
    %v277 = vpop.f32.mrb[0].mxu0
    %278 = vmatprep.mubr.bf16.mxu0 0
    %279 = vmatmul.mubr.bf16.gmra.mrb[0].mxu0 %v176
    %v280 = vpop.f32.mrb[0].mxu0
    %v281 = vadd.f32 %v156, %v280
    %v282 = vpop.f32.mrb[0].mxu0
    %v283 = vpop.f32.mrb[0].mxu0
    %v284 = vadd.f32 %v156, %v283
    %v285 = vpop.f32.mrb[0].mxu0
    %286 = vmatprep.mubr.bf16.mxu0 0
    %287 = vmatmul.mubr.bf16.gmra.mrb[0].mxu0 %v177
    %v288 = vpop.f32.mrb[0].mxu0
    %v289 = vadd.f32 %v156, %v288
    %v290 = vpop.f32.mrb[0].mxu0
    %v291 = vpop.f32.mrb[0].mxu0
    %v292 = vadd.f32 %v156, %v291
    %v293 = vpop.f32.mrb[0].mxu0
    %294 = vdwg.mxu0
    %v295 = vld [vmem:[#allocation7] sm:$0xf]
    %v296 = vld [vmem:[#allocation7 + $0x4] sm:$0xf]
    %v297 = vld [vmem:[#allocation7 + $0x8] sm:$0xf]
    %v298 = vld [vmem:[#allocation7 + $0xc] sm:$0xf]
    %v299 = vld [vmem:[#allocation7 + $0x10] sm:$0xf]
    %v300 = vld [vmem:[#allocation7 + $0x14] sm:$0xf]
    %v301 = vld [vmem:[#allocation7 + $0x18] sm:$0xf]
    %v302 = vld [vmem:[#allocation7 + $0x1c] sm:$0xf]
    %v303 = vld [vmem:[#allocation7 + $0x20] sm:$0xf]
    %v304 = vld [vmem:[#allocation7 + $0x24] sm:$0xf]
    %v305 = vld [vmem:[#allocation7 + $0x28] sm:$0xf]
    %v306 = vld [vmem:[#allocation7 + $0x2c] sm:$0xf]
    %v307 = vld [vmem:[#allocation7 + $0x30] sm:$0xf]
    %v308 = vld [vmem:[#allocation7 + $0x34] sm:$0xf]
    %v309 = vld [vmem:[#allocation7 + $0x38] sm:$0xf]
    %v310 = vld [vmem:[#allocation7 + $0x3c] sm:$0xf]
    %v311 = vld [vmem:[#allocation10] sm:$0xf]
    %v312 = vld [vmem:[#allocation10 + $0x4] sm:$0xf]
    %v313 = vld [vmem:[#allocation10 + $0x8] sm:$0xf]
    %v314 = vld [vmem:[#allocation10 + $0xc] sm:$0xf]
    %v315 = vld [vmem:[#allocation10 + $0x10] sm:$0xf]
    %v316 = vld [vmem:[#allocation10 + $0x14] sm:$0xf]
    %v317 = vld [vmem:[#allocation10 + $0x18] sm:$0xf]
    %v318 = vld [vmem:[#allocation10 + $0x1c] sm:$0xf]
    %v319 = vld [vmem:[#allocation10 + $0x20] sm:$0xf]
    %v320 = vld [vmem:[#allocation10 + $0x24] sm:$0xf]
    %v321 = vld [vmem:[#allocation10 + $0x28] sm:$0xf]
    %v322 = vld [vmem:[#allocation10 + $0x2c] sm:$0xf]
    %v323 = vld [vmem:[#allocation10 + $0x30] sm:$0xf]
    %v324 = vld [vmem:[#allocation10 + $0x34] sm:$0xf]
    %v325 = vld [vmem:[#allocation10 + $0x38] sm:$0xf]
    %v326 = vld [vmem:[#allocation10 + $0x3c] sm:$0xf]
    %v327 = vld [vmem:[#allocation11] sm:$0xf]
    %v328 = vld [vmem:[#allocation11 + $0x4] sm:$0xf]
    %v329 = vld [vmem:[#allocation11 + $0x8] sm:$0xf]
    %v330 = vld [vmem:[#allocation11 + $0xc] sm:$0xf]
    %v331 = vld [vmem:[#allocation11 + $0x10] sm:$0xf]
    %v332 = vld [vmem:[#allocation11 + $0x14] sm:$0xf]
    %v333 = vld [vmem:[#allocation11 + $0x18] sm:$0xf]
    %v334 = vld [vmem:[#allocation11 + $0x1c] sm:$0xf]
    %v335 = vld [vmem:[#allocation11 + $0x20] sm:$0xf]
    %v336 = vld [vmem:[#allocation11 + $0x24] sm:$0xf]
    %v337 = vld [vmem:[#allocation11 + $0x28] sm:$0xf]
    %v338 = vld [vmem:[#allocation11 + $0x2c] sm:$0xf]
    %v339 = vld [vmem:[#allocation11 + $0x30] sm:$0xf]
    %v340 = vld [vmem:[#allocation11 + $0x34] sm:$0xf]
    %v341 = vld [vmem:[#allocation11 + $0x38] sm:$0xf]
    %v342 = vld [vmem:[#allocation11 + $0x3c] sm:$0xf]
    %v343 = vld [vmem:[#allocation13] sm:$0x1]
    %v345 = vlaneseq
    %v346 = vshrl.u32 %v345, 7
    %v347 = vsub.s32 0, %v346
    %v348 = vrot.slane %v343, %v347
    %v366 = vunpack.c.l.b16 %v327
    %v367 = vunpack.c.l.b16 %v328
    %v368 = vunpack.c.l.b16 %v329
    %v369 = vunpack.c.l.b16 %v330
    %v370 = vunpack.c.l.b16 %v331
    %v371 = vunpack.c.l.b16 %v332
    %v372 = vunpack.c.l.b16 %v333
    %v373 = vunpack.c.l.b16 %v334
    %v374 = vunpack.c.l.b16 %v335
    %v375 = vunpack.c.l.b16 %v336
    %v376 = vunpack.c.l.b16 %v337
    %v377 = vunpack.c.l.b16 %v338
    %v378 = vunpack.c.l.b16 %v339
    %v379 = vunpack.c.l.b16 %v340
    %v380 = vunpack.c.l.b16 %v341
    %v381 = vunpack.c.l.b16 %v342
    %v382 = vpack.c.b16 %v367, %v366
    %v383 = vpack.c.b16 %v369, %v368
    %v384 = vpack.c.b16 %v371, %v370
    %v385 = vpack.c.b16 %v373, %v372
    %v386 = vpack.c.b16 %v375, %v374
    %v387 = vpack.c.b16 %v377, %v376
    %v388 = vpack.c.b16 %v379, %v378
    %v389 = vpack.c.b16 %v381, %v380
    %398 = vmatprep.subr.bf16.mxu0 0
    %399 = vmatpush1.bf16.msra.mxu0 %v382
    %400 = vmatprep.subr.bf16.mxu0 0
    %401 = vmatpush1.bf16.msra.mxu0 %v383
    %402 = vmatprep.subr.bf16.mxu0 0
    %403 = vmatpush1.bf16.msra.mxu0 %v384
    %404 = vmatprep.subr.bf16.mxu0 0
    %405 = vmatpush1.bf16.msra.mxu0 %v385
    %406 = vmatprep.subr.bf16.mxu0 0
    %407 = vmatpush1.bf16.msra.mxu0 %v386
    %408 = vmatprep.subr.bf16.mxu0 0
    %409 = vmatpush1.bf16.msra.mxu0 %v387
    %410 = vmatprep.subr.bf16.mxu0 0
    %411 = vmatpush1.bf16.msra.mxu0 %v388
    %412 = vmatprep.subr.bf16.mxu0 0
    %413 = vmatpush1.bf16.msra.mxu0 %v389
    %414 = vmatprep.subr.bf16.mxu0 0
    %415 = vmatpush1.bf16.msra.mxu0 0
    %416 = vmatprep.subr.bf16.mxu0 0
    %417 = vmatpush1.bf16.msra.mxu0 0
    %418 = vmatprep.subr.bf16.mxu0 0
    %419 = vmatpush1.bf16.msra.mxu0 0
    %420 = vmatprep.subr.bf16.mxu0 0
    %421 = vmatpush1.bf16.msra.mxu0 0
    %422 = vmatprep.subr.bf16.mxu0 0
    %423 = vmatpush1.bf16.msra.mxu0 0
    %424 = vmatprep.subr.bf16.mxu0 0
    %425 = vmatpush1.bf16.msra.mxu0 0
    %426 = vmatprep.subr.bf16.mxu0 0
    %427 = vmatpush1.bf16.msra.mxu0 0
    %428 = vmatprep.subr.bf16.mxu0 0
    %429 = vmatpush1.bf16.msra.mxu0 0
    %430 = vmatprep.mubr.bf16.mxu0 0
    %431 = vmatmul.mubr.bf16.gmra.mrb[0].mxu0 0
    %v432 = vpop.f32.mrb[0].mxu0
    %v433 = vadd.f32 0.0, %v432
    %v434 = vpop.f32.mrb[0].mxu0
    %v435 = vpop.f32.mrb[0].mxu0
    %v436 = vpop.f32.mrb[0].mxu0
    %437 = vdwg.mxu0
    %v454 = vunpack.c.l.b16 %v295
    %v455 = vunpack.c.l.b16 %v296
    %v456 = vunpack.c.l.b16 %v297
    %v457 = vunpack.c.l.b16 %v298
    %v458 = vunpack.c.l.b16 %v299
    %v459 = vunpack.c.l.b16 %v300
    %v460 = vunpack.c.l.b16 %v301
    %v461 = vunpack.c.l.b16 %v302
    %v462 = vunpack.c.l.b16 %v303
    %v463 = vunpack.c.l.b16 %v304
    %v464 = vunpack.c.l.b16 %v305
    %v465 = vunpack.c.l.b16 %v306
    %v466 = vunpack.c.l.b16 %v307
    %v467 = vunpack.c.l.b16 %v308
    %v468 = vunpack.c.l.b16 %v309
    %v469 = vunpack.c.l.b16 %v310
    %v470 = vpack.c.b16 %v455, %v454
    %v471 = vpack.c.b16 %v457, %v456
    %v472 = vpack.c.b16 %v459, %v458
    %v473 = vpack.c.b16 %v461, %v460
    %v474 = vpack.c.b16 %v463, %v462
    %v475 = vpack.c.b16 %v465, %v464
    %v476 = vpack.c.b16 %v467, %v466
    %v477 = vpack.c.b16 %v469, %v468
    %486 = vmatprep.subr.bf16.mxu0 0
    %487 = vmatpush1.bf16.msra.mxu0 %v470
    %488 = vmatprep.subr.bf16.mxu0 0
    %489 = vmatpush1.bf16.msra.mxu0 %v471
    %490 = vmatprep.subr.bf16.mxu0 0
    %491 = vmatpush1.bf16.msra.mxu0 %v472
    %492 = vmatprep.subr.bf16.mxu0 0
    %493 = vmatpush1.bf16.msra.mxu0 %v473
    %494 = vmatprep.subr.bf16.mxu0 0
    %495 = vmatpush1.bf16.msra.mxu0 %v474
    %496 = vmatprep.subr.bf16.mxu0 0
    %497 = vmatpush1.bf16.msra.mxu0 %v475
    %498 = vmatprep.subr.bf16.mxu0 0
    %499 = vmatpush1.bf16.msra.mxu0 %v476
    %500 = vmatprep.subr.bf16.mxu0 0
    %501 = vmatpush1.bf16.msra.mxu0 %v477
    %502 = vmatprep.subr.bf16.mxu0 0
    %503 = vmatpush1.bf16.msra.mxu0 0
    %504 = vmatprep.subr.bf16.mxu0 0
    %505 = vmatpush1.bf16.msra.mxu0 0
    %506 = vmatprep.subr.bf16.mxu0 0
    %507 = vmatpush1.bf16.msra.mxu0 0
    %508 = vmatprep.subr.bf16.mxu0 0
    %509 = vmatpush1.bf16.msra.mxu0 0
    %510 = vmatprep.subr.bf16.mxu0 0
    %511 = vmatpush1.bf16.msra.mxu0 0
    %512 = vmatprep.subr.bf16.mxu0 0
    %513 = vmatpush1.bf16.msra.mxu0 0
    %514 = vmatprep.subr.bf16.mxu0 0
    %515 = vmatpush1.bf16.msra.mxu0 0
    %516 = vmatprep.subr.bf16.mxu0 0
    %517 = vmatpush1.bf16.msra.mxu0 0
    %518 = vmatprep.mubr.bf16.mxu0 0
    %519 = vmatmul.mubr.bf16.gmra.mrb[0].mxu0 0
    %v520 = vpop.f32.mrb[0].mxu0
    %v521 = vadd.f32 0.0, %v520
    %v522 = vpop.f32.mrb[0].mxu0
    %v523 = vpop.f32.mrb[0].mxu0
    %v524 = vpop.f32.mrb[0].mxu0
    %525 = vdwg.mxu0
    %v526 = vadd.f32 %v265, %v521
    %v527 = vtanh.pop %v526
    %v528 = vpack.c.bf16 %v527, %v527
    %v545 = vunpack.c.l.b16 %v311
    %v546 = vunpack.c.l.b16 %v312
    %v547 = vunpack.c.l.b16 %v313
    %v548 = vunpack.c.l.b16 %v314
    %v549 = vunpack.c.l.b16 %v315
    %v550 = vunpack.c.l.b16 %v316
    %v551 = vunpack.c.l.b16 %v317
    %v552 = vunpack.c.l.b16 %v318
    %v553 = vunpack.c.l.b16 %v319
    %v554 = vunpack.c.l.b16 %v320
    %v555 = vunpack.c.l.b16 %v321
    %v556 = vunpack.c.l.b16 %v322
    %v557 = vunpack.c.l.b16 %v323
    %v558 = vunpack.c.l.b16 %v324
    %v559 = vunpack.c.l.b16 %v325
    %v560 = vunpack.c.l.b16 %v326
    %v561 = vpack.c.b16 %v546, %v545
    %v562 = vpack.c.b16 %v548, %v547
    %v563 = vpack.c.b16 %v550, %v549
    %v564 = vpack.c.b16 %v552, %v551
    %v565 = vpack.c.b16 %v554, %v553
    %v566 = vpack.c.b16 %v556, %v555
    %v567 = vpack.c.b16 %v558, %v557
    %v568 = vpack.c.b16 %v560, %v559
    %577 = vmatprep.subr.bf16.mxu0 0
    %578 = vmatpush1.bf16.msra.mxu0 %v561
    %579 = vmatprep.subr.bf16.mxu0 0
    %580 = vmatpush1.bf16.msra.mxu0 %v562
    %581 = vmatprep.subr.bf16.mxu0 0
    %582 = vmatpush1.bf16.msra.mxu0 %v563
    %583 = vmatprep.subr.bf16.mxu0 0
    %584 = vmatpush1.bf16.msra.mxu0 %v564
    %585 = vmatprep.subr.bf16.mxu0 0
    %586 = vmatpush1.bf16.msra.mxu0 %v565
    %587 = vmatprep.subr.bf16.mxu0 0
    %588 = vmatpush1.bf16.msra.mxu0 %v566
    %589 = vmatprep.subr.bf16.mxu0 0
    %590 = vmatpush1.bf16.msra.mxu0 %v567
    %591 = vmatprep.subr.bf16.mxu0 0
    %592 = vmatpush1.bf16.msra.mxu0 %v568
    %593 = vmatprep.subr.bf16.mxu0 0
    %594 = vmatpush1.bf16.msra.mxu0 0
    %595 = vmatprep.subr.bf16.mxu0 0
    %596 = vmatpush1.bf16.msra.mxu0 0
    %597 = vmatprep.subr.bf16.mxu0 0
    %598 = vmatpush1.bf16.msra.mxu0 0
    %599 = vmatprep.subr.bf16.mxu0 0
    %600 = vmatpush1.bf16.msra.mxu0 0
    %601 = vmatprep.subr.bf16.mxu0 0
    %602 = vmatpush1.bf16.msra.mxu0 0
    %603 = vmatprep.subr.bf16.mxu0 0
    %604 = vmatpush1.bf16.msra.mxu0 0
    %605 = vmatprep.subr.bf16.mxu0 0
    %606 = vmatpush1.bf16.msra.mxu0 0
    %607 = vmatprep.subr.bf16.mxu0 0
    %608 = vmatpush1.bf16.msra.mxu0 0
    %609 = vmatprep.mubr.bf16.mxu0 0
    %610 = vmatmul.mubr.bf16.gmra.mrb[0].mxu0 %v528
    %v611 = vpop.f32.mrb[0].mxu0
    %v612 = vadd.f32 %v433, %v611
    %v613 = vpop.f32.mrb[0].mxu0
    %v614 = vpop.f32.mrb[0].mxu0
    %v615 = vpop.f32.mrb[0].mxu0
    %616 = vdwg.mxu0
    %v617 = vadd.f32 %v612, %v348
    %v618 = vtanh.pop %v617
    %v619 = vpack.c.bf16 %v618, %v618
    %620 = vmatprep.subr.bf16.mxu0 0
    %621 = vmatpush1.bf16.msra.mxu0 %v382
    %622 = vmatprep.subr.bf16.mxu0 0
    %623 = vmatpush1.bf16.msra.mxu0 %v383
    %624 = vmatprep.subr.bf16.mxu0 0
    %625 = vmatpush1.bf16.msra.mxu0 %v384
    %626 = vmatprep.subr.bf16.mxu0 0
    %627 = vmatpush1.bf16.msra.mxu0 %v385
    %628 = vmatprep.subr.bf16.mxu0 0
    %629 = vmatpush1.bf16.msra.mxu0 %v386
    %630 = vmatprep.subr.bf16.mxu0 0
    %631 = vmatpush1.bf16.msra.mxu0 %v387
    %632 = vmatprep.subr.bf16.mxu0 0
    %633 = vmatpush1.bf16.msra.mxu0 %v388
    %634 = vmatprep.subr.bf16.mxu0 0
    %635 = vmatpush1.bf16.msra.mxu0 %v389
    %636 = vmatprep.subr.bf16.mxu0 0
    %637 = vmatpush1.bf16.msra.mxu0 0
    %638 = vmatprep.subr.bf16.mxu0 0
    %639 = vmatpush1.bf16.msra.mxu0 0
    %640 = vmatprep.subr.bf16.mxu0 0
    %641 = vmatpush1.bf16.msra.mxu0 0
    %642 = vmatprep.subr.bf16.mxu0 0
    %643 = vmatpush1.bf16.msra.mxu0 0
    %644 = vmatprep.subr.bf16.mxu0 0
    %645 = vmatpush1.bf16.msra.mxu0 0
    %646 = vmatprep.subr.bf16.mxu0 0
    %647 = vmatpush1.bf16.msra.mxu0 0
    %648 = vmatprep.subr.bf16.mxu0 0
    %649 = vmatpush1.bf16.msra.mxu0 0
    %650 = vmatprep.subr.bf16.mxu0 0
    %651 = vmatpush1.bf16.msra.mxu0 0
    %652 = vmatprep.mubr.bf16.mxu0 0
    %653 = vmatmul.mubr.bf16.gmra.mrb[0].mxu0 %v619
    %v654 = vpop.f32.mrb[0].mxu0
    %v655 = vadd.f32 0.0, %v654
    %v656 = vpop.f32.mrb[0].mxu0
    %v657 = vpop.f32.mrb[0].mxu0
    %v658 = vpop.f32.mrb[0].mxu0
    %659 = vdwg.mxu0
    %660 = vmatprep.subr.bf16.mxu0 0
    %661 = vmatpush1.bf16.msra.mxu0 %v470
    %662 = vmatprep.subr.bf16.mxu0 0
    %663 = vmatpush1.bf16.msra.mxu0 %v471
    %664 = vmatprep.subr.bf16.mxu0 0
    %665 = vmatpush1.bf16.msra.mxu0 %v472
    %666 = vmatprep.subr.bf16.mxu0 0
    %667 = vmatpush1.bf16.msra.mxu0 %v473
    %668 = vmatprep.subr.bf16.mxu0 0
    %669 = vmatpush1.bf16.msra.mxu0 %v474
    %670 = vmatprep.subr.bf16.mxu0 0
    %671 = vmatpush1.bf16.msra.mxu0 %v475
    %672 = vmatprep.subr.bf16.mxu0 0
    %673 = vmatpush1.bf16.msra.mxu0 %v476
    %674 = vmatprep.subr.bf16.mxu0 0
    %675 = vmatpush1.bf16.msra.mxu0 %v477
    %676 = vmatprep.subr.bf16.mxu0 0
    %677 = vmatpush1.bf16.msra.mxu0 0
    %678 = vmatprep.subr.bf16.mxu0 0
    %679 = vmatpush1.bf16.msra.mxu0 0
    %680 = vmatprep.subr.bf16.mxu0 0
    %681 = vmatpush1.bf16.msra.mxu0 0
    %682 = vmatprep.subr.bf16.mxu0 0
    %683 = vmatpush1.bf16.msra.mxu0 0
    %684 = vmatprep.subr.bf16.mxu0 0
    %685 = vmatpush1.bf16.msra.mxu0 0
    %686 = vmatprep.subr.bf16.mxu0 0
    %687 = vmatpush1.bf16.msra.mxu0 0
    %688 = vmatprep.subr.bf16.mxu0 0
    %689 = vmatpush1.bf16.msra.mxu0 0
    %690 = vmatprep.subr.bf16.mxu0 0
    %691 = vmatpush1.bf16.msra.mxu0 0
    %692 = vmatprep.mubr.bf16.mxu0 0
    %693 = vmatmul.mubr.bf16.gmra.mrb[0].mxu0 %v528
    %v694 = vpop.f32.mrb[0].mxu0
    %v695 = vadd.f32 0.0, %v694
    %v696 = vpop.f32.mrb[0].mxu0
    %v697 = vpop.f32.mrb[0].mxu0
    %v698 = vpop.f32.mrb[0].mxu0
    %699 = vdwg.mxu0
    %v700 = vadd.f32 %v268, %v695
    %v701 = vtanh.pop %v700
    %v702 = vpack.c.bf16 %v701, %v701
    %703 = vmatprep.subr.bf16.mxu0 0
    %704 = vmatpush1.bf16.msra.mxu0 %v561
    %705 = vmatprep.subr.bf16.mxu0 0
    %706 = vmatpush1.bf16.msra.mxu0 %v562
    %707 = vmatprep.subr.bf16.mxu0 0
    %708 = vmatpush1.bf16.msra.mxu0 %v563
    %709 = vmatprep.subr.bf16.mxu0 0
    %710 = vmatpush1.bf16.msra.mxu0 %v564
    %711 = vmatprep.subr.bf16.mxu0 0
    %712 = vmatpush1.bf16.msra.mxu0 %v565
    %713 = vmatprep.subr.bf16.mxu0 0
    %714 = vmatpush1.bf16.msra.mxu0 %v566
    %715 = vmatprep.subr.bf16.mxu0 0
    %716 = vmatpush1.bf16.msra.mxu0 %v567
    %717 = vmatprep.subr.bf16.mxu0 0
    %718 = vmatpush1.bf16.msra.mxu0 %v568
    %719 = vmatprep.subr.bf16.mxu0 0
    %720 = vmatpush1.bf16.msra.mxu0 0
    %721 = vmatprep.subr.bf16.mxu0 0
    %722 = vmatpush1.bf16.msra.mxu0 0
    %723 = vmatprep.subr.bf16.mxu0 0
    %724 = vmatpush1.bf16.msra.mxu0 0
    %725 = vmatprep.subr.bf16.mxu0 0
    %726 = vmatpush1.bf16.msra.mxu0 0
    %727 = vmatprep.subr.bf16.mxu0 0
    %728 = vmatpush1.bf16.msra.mxu0 0
    %729 = vmatprep.subr.bf16.mxu0 0
    %730 = vmatpush1.bf16.msra.mxu0 0
    %731 = vmatprep.subr.bf16.mxu0 0
    %732 = vmatpush1.bf16.msra.mxu0 0
    %733 = vmatprep.subr.bf16.mxu0 0
    %734 = vmatpush1.bf16.msra.mxu0 0
    %735 = vmatprep.mubr.bf16.mxu0 0
    %736 = vmatmul.mubr.bf16.gmra.mrb[0].mxu0 %v702
    %v737 = vpop.f32.mrb[0].mxu0
    %v738 = vadd.f32 %v655, %v737
    %v739 = vpop.f32.mrb[0].mxu0
    %v740 = vpop.f32.mrb[0].mxu0
    %v741 = vpop.f32.mrb[0].mxu0
    %742 = vdwg.mxu0
    %v743 = vadd.f32 %v738, %v348
    %v744 = vtanh.pop %v743
    %v745 = vpack.c.bf16 %v744, %v744
    %746 = vmatprep.subr.bf16.mxu0 0
    %747 = vmatpush1.bf16.msra.mxu0 %v382
    %748 = vmatprep.subr.bf16.mxu0 0
    %749 = vmatpush1.bf16.msra.mxu0 %v383
    %750 = vmatprep.subr.bf16.mxu0 0
    %751 = vmatpush1.bf16.msra.mxu0 %v384
    %752 = vmatprep.subr.bf16.mxu0 0
    %753 = vmatpush1.bf16.msra.mxu0 %v385
    %754 = vmatprep.subr.bf16.mxu0 0
    %755 = vmatpush1.bf16.msra.mxu0 %v386
    %756 = vmatprep.subr.bf16.mxu0 0
    %757 = vmatpush1.bf16.msra.mxu0 %v387
    %758 = vmatprep.subr.bf16.mxu0 0
    %759 = vmatpush1.bf16.msra.mxu0 %v388
    %760 = vmatprep.subr.bf16.mxu0 0
    %761 = vmatpush1.bf16.msra.mxu0 %v389
    %762 = vmatprep.subr.bf16.mxu0 0
    %763 = vmatpush1.bf16.msra.mxu0 0
    %764 = vmatprep.subr.bf16.mxu0 0
    %765 = vmatpush1.bf16.msra.mxu0 0
    %766 = vmatprep.subr.bf16.mxu0 0
    %767 = vmatpush1.bf16.msra.mxu0 0
    %768 = vmatprep.subr.bf16.mxu0 0
    %769 = vmatpush1.bf16.msra.mxu0 0
    %770 = vmatprep.subr.bf16.mxu0 0
    %771 = vmatpush1.bf16.msra.mxu0 0
    %772 = vmatprep.subr.bf16.mxu0 0
    %773 = vmatpush1.bf16.msra.mxu0 0
    %774 = vmatprep.subr.bf16.mxu0 0
    %775 = vmatpush1.bf16.msra.mxu0 0
    %776 = vmatprep.subr.bf16.mxu0 0
    %777 = vmatpush1.bf16.msra.mxu0 0
    %778 = vmatprep.mubr.bf16.mxu0 0
    %779 = vmatmul.mubr.bf16.gmra.mrb[0].mxu0 %v745
    %v780 = vpop.f32.mrb[0].mxu0
    %v781 = vadd.f32 0.0, %v780
    %v782 = vpop.f32.mrb[0].mxu0
    %v783 = vpop.f32.mrb[0].mxu0
    %v784 = vpop.f32.mrb[0].mxu0
    %785 = vdwg.mxu0
    %786 = vmatprep.subr.bf16.mxu0 0
    %787 = vmatpush1.bf16.msra.mxu0 %v470
    %788 = vmatprep.subr.bf16.mxu0 0
    %789 = vmatpush1.bf16.msra.mxu0 %v471
    %790 = vmatprep.subr.bf16.mxu0 0
    %791 = vmatpush1.bf16.msra.mxu0 %v472
    %792 = vmatprep.subr.bf16.mxu0 0
    %793 = vmatpush1.bf16.msra.mxu0 %v473
    %794 = vmatprep.subr.bf16.mxu0 0
    %795 = vmatpush1.bf16.msra.mxu0 %v474
    %796 = vmatprep.subr.bf16.mxu0 0
    %797 = vmatpush1.bf16.msra.mxu0 %v475
    %798 = vmatprep.subr.bf16.mxu0 0
    %799 = vmatpush1.bf16.msra.mxu0 %v476
    %800 = vmatprep.subr.bf16.mxu0 0
    %801 = vmatpush1.bf16.msra.mxu0 %v477
    %802 = vmatprep.subr.bf16.mxu0 0
    %803 = vmatpush1.bf16.msra.mxu0 0
    %804 = vmatprep.subr.bf16.mxu0 0
    %805 = vmatpush1.bf16.msra.mxu0 0
    %806 = vmatprep.subr.bf16.mxu0 0
    %807 = vmatpush1.bf16.msra.mxu0 0
    %808 = vmatprep.subr.bf16.mxu0 0
    %809 = vmatpush1.bf16.msra.mxu0 0
    %810 = vmatprep.subr.bf16.mxu0 0
    %811 = vmatpush1.bf16.msra.mxu0 0
    %812 = vmatprep.subr.bf16.mxu0 0
    %813 = vmatpush1.bf16.msra.mxu0 0
    %814 = vmatprep.subr.bf16.mxu0 0
    %815 = vmatpush1.bf16.msra.mxu0 0
    %816 = vmatprep.subr.bf16.mxu0 0
    %817 = vmatpush1.bf16.msra.mxu0 0
    %818 = vmatprep.mubr.bf16.mxu0 0
    %819 = vmatmul.mubr.bf16.gmra.mrb[0].mxu0 %v702
    %v820 = vpop.f32.mrb[0].mxu0
    %v821 = vadd.f32 0.0, %v820
    %v822 = vpop.f32.mrb[0].mxu0
    %v823 = vpop.f32.mrb[0].mxu0
    %v824 = vpop.f32.mrb[0].mxu0
    %825 = vdwg.mxu0
    %v826 = vadd.f32 %v273, %v821
    %v827 = vtanh.pop %v826
    %v828 = vpack.c.bf16 %v827, %v827
    %829 = vmatprep.subr.bf16.mxu0 0
    %830 = vmatpush1.bf16.msra.mxu0 %v561
    %831 = vmatprep.subr.bf16.mxu0 0
    %832 = vmatpush1.bf16.msra.mxu0 %v562
    %833 = vmatprep.subr.bf16.mxu0 0
    %834 = vmatpush1.bf16.msra.mxu0 %v563
    %835 = vmatprep.subr.bf16.mxu0 0
    %836 = vmatpush1.bf16.msra.mxu0 %v564
    %837 = vmatprep.subr.bf16.mxu0 0
    %838 = vmatpush1.bf16.msra.mxu0 %v565
    %839 = vmatprep.subr.bf16.mxu0 0
    %840 = vmatpush1.bf16.msra.mxu0 %v566
    %841 = vmatprep.subr.bf16.mxu0 0
    %842 = vmatpush1.bf16.msra.mxu0 %v567
    %843 = vmatprep.subr.bf16.mxu0 0
    %844 = vmatpush1.bf16.msra.mxu0 %v568
    %845 = vmatprep.subr.bf16.mxu0 0
    %846 = vmatpush1.bf16.msra.mxu0 0
    %847 = vmatprep.subr.bf16.mxu0 0
    %848 = vmatpush1.bf16.msra.mxu0 0
    %849 = vmatprep.subr.bf16.mxu0 0
    %850 = vmatpush1.bf16.msra.mxu0 0
    %851 = vmatprep.subr.bf16.mxu0 0
    %852 = vmatpush1.bf16.msra.mxu0 0
    %853 = vmatprep.subr.bf16.mxu0 0
    %854 = vmatpush1.bf16.msra.mxu0 0
    %855 = vmatprep.subr.bf16.mxu0 0
    %856 = vmatpush1.bf16.msra.mxu0 0
    %857 = vmatprep.subr.bf16.mxu0 0
    %858 = vmatpush1.bf16.msra.mxu0 0
    %859 = vmatprep.subr.bf16.mxu0 0
    %860 = vmatpush1.bf16.msra.mxu0 0
    %861 = vmatprep.mubr.bf16.mxu0 0
    %862 = vmatmul.mubr.bf16.gmra.mrb[0].mxu0 %v828
    %v863 = vpop.f32.mrb[0].mxu0
    %v864 = vadd.f32 %v781, %v863
    %v865 = vpop.f32.mrb[0].mxu0
    %v866 = vpop.f32.mrb[0].mxu0
    %v867 = vpop.f32.mrb[0].mxu0
    %868 = vdwg.mxu0
    %v869 = vadd.f32 %v864, %v348
    %v870 = vtanh.pop %v869
    %v871 = vpack.c.bf16 %v870, %v870
    %872 = vmatprep.subr.bf16.mxu0 0
    %873 = vmatpush1.bf16.msra.mxu0 %v382
    %874 = vmatprep.subr.bf16.mxu0 0
    %875 = vmatpush1.bf16.msra.mxu0 %v383
    %876 = vmatprep.subr.bf16.mxu0 0
    %877 = vmatpush1.bf16.msra.mxu0 %v384
    %878 = vmatprep.subr.bf16.mxu0 0
    %879 = vmatpush1.bf16.msra.mxu0 %v385
    %880 = vmatprep.subr.bf16.mxu0 0
    %881 = vmatpush1.bf16.msra.mxu0 %v386
    %882 = vmatprep.subr.bf16.mxu0 0
    %883 = vmatpush1.bf16.msra.mxu0 %v387
    %884 = vmatprep.subr.bf16.mxu0 0
    %885 = vmatpush1.bf16.msra.mxu0 %v388
    %886 = vmatprep.subr.bf16.mxu0 0
    %887 = vmatpush1.bf16.msra.mxu0 %v389
    %888 = vmatprep.subr.bf16.mxu0 0
    %889 = vmatpush1.bf16.msra.mxu0 0
    %890 = vmatprep.subr.bf16.mxu0 0
    %891 = vmatpush1.bf16.msra.mxu0 0
    %892 = vmatprep.subr.bf16.mxu0 0
    %893 = vmatpush1.bf16.msra.mxu0 0
    %894 = vmatprep.subr.bf16.mxu0 0
    %895 = vmatpush1.bf16.msra.mxu0 0
    %896 = vmatprep.subr.bf16.mxu0 0
    %897 = vmatpush1.bf16.msra.mxu0 0
    %898 = vmatprep.subr.bf16.mxu0 0
    %899 = vmatpush1.bf16.msra.mxu0 0
    %900 = vmatprep.subr.bf16.mxu0 0
    %901 = vmatpush1.bf16.msra.mxu0 0
    %902 = vmatprep.subr.bf16.mxu0 0
    %903 = vmatpush1.bf16.msra.mxu0 0
    %904 = vmatprep.mubr.bf16.mxu0 0
    %905 = vmatmul.mubr.bf16.gmra.mrb[0].mxu0 %v871
    %v906 = vpop.f32.mrb[0].mxu0
    %v907 = vadd.f32 0.0, %v906
    %v908 = vpop.f32.mrb[0].mxu0
    %v909 = vpop.f32.mrb[0].mxu0
    %v910 = vpop.f32.mrb[0].mxu0
    %911 = vdwg.mxu0
    %912 = vmatprep.subr.bf16.mxu0 0
    %913 = vmatpush1.bf16.msra.mxu0 %v470
    %914 = vmatprep.subr.bf16.mxu0 0
    %915 = vmatpush1.bf16.msra.mxu0 %v471
    %916 = vmatprep.subr.bf16.mxu0 0
    %917 = vmatpush1.bf16.msra.mxu0 %v472
    %918 = vmatprep.subr.bf16.mxu0 0
    %919 = vmatpush1.bf16.msra.mxu0 %v473
    %920 = vmatprep.subr.bf16.mxu0 0
    %921 = vmatpush1.bf16.msra.mxu0 %v474
    %922 = vmatprep.subr.bf16.mxu0 0
    %923 = vmatpush1.bf16.msra.mxu0 %v475
    %924 = vmatprep.subr.bf16.mxu0 0
    %925 = vmatpush1.bf16.msra.mxu0 %v476
    %926 = vmatprep.subr.bf16.mxu0 0
    %927 = vmatpush1.bf16.msra.mxu0 %v477
    %928 = vmatprep.subr.bf16.mxu0 0
    %929 = vmatpush1.bf16.msra.mxu0 0
    %930 = vmatprep.subr.bf16.mxu0 0
    %931 = vmatpush1.bf16.msra.mxu0 0
    %932 = vmatprep.subr.bf16.mxu0 0
    %933 = vmatpush1.bf16.msra.mxu0 0
    %934 = vmatprep.subr.bf16.mxu0 0
    %935 = vmatpush1.bf16.msra.mxu0 0
    %936 = vmatprep.subr.bf16.mxu0 0
    %937 = vmatpush1.bf16.msra.mxu0 0
    %938 = vmatprep.subr.bf16.mxu0 0
    %939 = vmatpush1.bf16.msra.mxu0 0
    %940 = vmatprep.subr.bf16.mxu0 0
    %941 = vmatpush1.bf16.msra.mxu0 0
    %942 = vmatprep.subr.bf16.mxu0 0
    %943 = vmatpush1.bf16.msra.mxu0 0
    %944 = vmatprep.mubr.bf16.mxu0 0
    %945 = vmatmul.mubr.bf16.gmra.mrb[0].mxu0 %v828
    %v946 = vpop.f32.mrb[0].mxu0
    %v947 = vadd.f32 0.0, %v946
    %v948 = vpop.f32.mrb[0].mxu0
    %v949 = vpop.f32.mrb[0].mxu0
    %v950 = vpop.f32.mrb[0].mxu0
    %951 = vdwg.mxu0
    %v952 = vadd.f32 %v276, %v947
    %v953 = vtanh.pop %v952
    %v954 = vpack.c.bf16 %v953, %v953
    %955 = vmatprep.subr.bf16.mxu0 0
    %956 = vmatpush1.bf16.msra.mxu0 %v561
    %957 = vmatprep.subr.bf16.mxu0 0
    %958 = vmatpush1.bf16.msra.mxu0 %v562
    %959 = vmatprep.subr.bf16.mxu0 0
    %960 = vmatpush1.bf16.msra.mxu0 %v563
    %961 = vmatprep.subr.bf16.mxu0 0
    %962 = vmatpush1.bf16.msra.mxu0 %v564
    %963 = vmatprep.subr.bf16.mxu0 0
    %964 = vmatpush1.bf16.msra.mxu0 %v565
    %965 = vmatprep.subr.bf16.mxu0 0
    %966 = vmatpush1.bf16.msra.mxu0 %v566
    %967 = vmatprep.subr.bf16.mxu0 0
    %968 = vmatpush1.bf16.msra.mxu0 %v567
    %969 = vmatprep.subr.bf16.mxu0 0
    %970 = vmatpush1.bf16.msra.mxu0 %v568
    %971 = vmatprep.subr.bf16.mxu0 0
    %972 = vmatpush1.bf16.msra.mxu0 0
    %973 = vmatprep.subr.bf16.mxu0 0
    %974 = vmatpush1.bf16.msra.mxu0 0
    %975 = vmatprep.subr.bf16.mxu0 0
    %976 = vmatpush1.bf16.msra.mxu0 0
    %977 = vmatprep.subr.bf16.mxu0 0
    %978 = vmatpush1.bf16.msra.mxu0 0
    %979 = vmatprep.subr.bf16.mxu0 0
    %980 = vmatpush1.bf16.msra.mxu0 0
    %981 = vmatprep.subr.bf16.mxu0 0
    %982 = vmatpush1.bf16.msra.mxu0 0
    %983 = vmatprep.subr.bf16.mxu0 0
    %984 = vmatpush1.bf16.msra.mxu0 0
    %985 = vmatprep.subr.bf16.mxu0 0
    %986 = vmatpush1.bf16.msra.mxu0 0
    %987 = vmatprep.mubr.bf16.mxu0 0
    %988 = vmatmul.mubr.bf16.gmra.mrb[0].mxu0 %v954
    %v989 = vpop.f32.mrb[0].mxu0
    %v990 = vadd.f32 %v907, %v989
    %v991 = vpop.f32.mrb[0].mxu0
    %v992 = vpop.f32.mrb[0].mxu0
    %v993 = vpop.f32.mrb[0].mxu0
    %994 = vdwg.mxu0
    %v995 = vadd.f32 %v990, %v348
    %v996 = vtanh.pop %v995
    %v997 = vpack.c.bf16 %v996, %v996
    %998 = vmatprep.subr.bf16.mxu0 0
    %999 = vmatpush1.bf16.msra.mxu0 %v382
    %1000 = vmatprep.subr.bf16.mxu0 0
    %1001 = vmatpush1.bf16.msra.mxu0 %v383
    %1002 = vmatprep.subr.bf16.mxu0 0
    %1003 = vmatpush1.bf16.msra.mxu0 %v384
    %1004 = vmatprep.subr.bf16.mxu0 0
    %1005 = vmatpush1.bf16.msra.mxu0 %v385
    %1006 = vmatprep.subr.bf16.mxu0 0
    %1007 = vmatpush1.bf16.msra.mxu0 %v386
    %1008 = vmatprep.subr.bf16.mxu0 0
    %1009 = vmatpush1.bf16.msra.mxu0 %v387
    %1010 = vmatprep.subr.bf16.mxu0 0
    %1011 = vmatpush1.bf16.msra.mxu0 %v388
    %1012 = vmatprep.subr.bf16.mxu0 0
    %1013 = vmatpush1.bf16.msra.mxu0 %v389
    %1014 = vmatprep.subr.bf16.mxu0 0
    %1015 = vmatpush1.bf16.msra.mxu0 0
    %1016 = vmatprep.subr.bf16.mxu0 0
    %1017 = vmatpush1.bf16.msra.mxu0 0
    %1018 = vmatprep.subr.bf16.mxu0 0
    %1019 = vmatpush1.bf16.msra.mxu0 0
    %1020 = vmatprep.subr.bf16.mxu0 0
    %1021 = vmatpush1.bf16.msra.mxu0 0
    %1022 = vmatprep.subr.bf16.mxu0 0
    %1023 = vmatpush1.bf16.msra.mxu0 0
    %1024 = vmatprep.subr.bf16.mxu0 0
    %1025 = vmatpush1.bf16.msra.mxu0 0
    %1026 = vmatprep.subr.bf16.mxu0 0
    %1027 = vmatpush1.bf16.msra.mxu0 0
    %1028 = vmatprep.subr.bf16.mxu0 0
    %1029 = vmatpush1.bf16.msra.mxu0 0
    %1030 = vmatprep.mubr.bf16.mxu0 0
    %1031 = vmatmul.mubr.bf16.gmra.mrb[0].mxu0 %v997
    %v1032 = vpop.f32.mrb[0].mxu0
    %v1033 = vadd.f32 0.0, %v1032
    %v1034 = vpop.f32.mrb[0].mxu0
    %v1035 = vpop.f32.mrb[0].mxu0
    %v1036 = vpop.f32.mrb[0].mxu0
    %1037 = vdwg.mxu0
    %1038 = vmatprep.subr.bf16.mxu0 0
    %1039 = vmatpush1.bf16.msra.mxu0 %v470
    %1040 = vmatprep.subr.bf16.mxu0 0
    %1041 = vmatpush1.bf16.msra.mxu0 %v471
    %1042 = vmatprep.subr.bf16.mxu0 0
    %1043 = vmatpush1.bf16.msra.mxu0 %v472
    %1044 = vmatprep.subr.bf16.mxu0 0
    %1045 = vmatpush1.bf16.msra.mxu0 %v473
    %1046 = vmatprep.subr.bf16.mxu0 0
    %1047 = vmatpush1.bf16.msra.mxu0 %v474
    %1048 = vmatprep.subr.bf16.mxu0 0
    %1049 = vmatpush1.bf16.msra.mxu0 %v475
    %1050 = vmatprep.subr.bf16.mxu0 0
    %1051 = vmatpush1.bf16.msra.mxu0 %v476
    %1052 = vmatprep.subr.bf16.mxu0 0
    %1053 = vmatpush1.bf16.msra.mxu0 %v477
    %1054 = vmatprep.subr.bf16.mxu0 0
    %1055 = vmatpush1.bf16.msra.mxu0 0
    %1056 = vmatprep.subr.bf16.mxu0 0
    %1057 = vmatpush1.bf16.msra.mxu0 0
    %1058 = vmatprep.subr.bf16.mxu0 0
    %1059 = vmatpush1.bf16.msra.mxu0 0
    %1060 = vmatprep.subr.bf16.mxu0 0
    %1061 = vmatpush1.bf16.msra.mxu0 0
    %1062 = vmatprep.subr.bf16.mxu0 0
    %1063 = vmatpush1.bf16.msra.mxu0 0
    %1064 = vmatprep.subr.bf16.mxu0 0
    %1065 = vmatpush1.bf16.msra.mxu0 0
    %1066 = vmatprep.subr.bf16.mxu0 0
    %1067 = vmatpush1.bf16.msra.mxu0 0
    %1068 = vmatprep.subr.bf16.mxu0 0
    %1069 = vmatpush1.bf16.msra.mxu0 0
    %1070 = vmatprep.mubr.bf16.mxu0 0
    %1071 = vmatmul.mubr.bf16.gmra.mrb[0].mxu0 %v954
    %v1072 = vpop.f32.mrb[0].mxu0
    %v1073 = vadd.f32 0.0, %v1072
    %v1074 = vpop.f32.mrb[0].mxu0
    %v1075 = vpop.f32.mrb[0].mxu0
    %v1076 = vpop.f32.mrb[0].mxu0
    %1077 = vdwg.mxu0
    %v1078 = vadd.f32 %v281, %v1073
    %v1079 = vtanh.pop %v1078
    %v1080 = vpack.c.bf16 %v1079, %v1079
    %1081 = vmatprep.subr.bf16.mxu0 0
    %1082 = vmatpush1.bf16.msra.mxu0 %v561
    %1083 = vmatprep.subr.bf16.mxu0 0
    %1084 = vmatpush1.bf16.msra.mxu0 %v562
    %1085 = vmatprep.subr.bf16.mxu0 0
    %1086 = vmatpush1.bf16.msra.mxu0 %v563
    %1087 = vmatprep.subr.bf16.mxu0 0
    %1088 = vmatpush1.bf16.msra.mxu0 %v564
    %1089 = vmatprep.subr.bf16.mxu0 0
    %1090 = vmatpush1.bf16.msra.mxu0 %v565
    %1091 = vmatprep.subr.bf16.mxu0 0
    %1092 = vmatpush1.bf16.msra.mxu0 %v566
    %1093 = vmatprep.subr.bf16.mxu0 0
    %1094 = vmatpush1.bf16.msra.mxu0 %v567
    %1095 = vmatprep.subr.bf16.mxu0 0
    %1096 = vmatpush1.bf16.msra.mxu0 %v568
    %1097 = vmatprep.subr.bf16.mxu0 0
    %1098 = vmatpush1.bf16.msra.mxu0 0
    %1099 = vmatprep.subr.bf16.mxu0 0
    %1100 = vmatpush1.bf16.msra.mxu0 0
    %1101 = vmatprep.subr.bf16.mxu0 0
    %1102 = vmatpush1.bf16.msra.mxu0 0
    %1103 = vmatprep.subr.bf16.mxu0 0
    %1104 = vmatpush1.bf16.msra.mxu0 0
    %1105 = vmatprep.subr.bf16.mxu0 0
    %1106 = vmatpush1.bf16.msra.mxu0 0
    %1107 = vmatprep.subr.bf16.mxu0 0
    %1108 = vmatpush1.bf16.msra.mxu0 0
    %1109 = vmatprep.subr.bf16.mxu0 0
    %1110 = vmatpush1.bf16.msra.mxu0 0
    %1111 = vmatprep.subr.bf16.mxu0 0
    %1112 = vmatpush1.bf16.msra.mxu0 0
    %1113 = vmatprep.mubr.bf16.mxu0 0
    %1114 = vmatmul.mubr.bf16.gmra.mrb[0].mxu0 %v1080
    %v1115 = vpop.f32.mrb[0].mxu0
    %v1116 = vadd.f32 %v1033, %v1115
    %v1117 = vpop.f32.mrb[0].mxu0
    %v1118 = vpop.f32.mrb[0].mxu0
    %v1119 = vpop.f32.mrb[0].mxu0
    %1120 = vdwg.mxu0
    %v1121 = vadd.f32 %v1116, %v348
    %v1122 = vtanh.pop %v1121
    %v1123 = vpack.c.bf16 %v1122, %v1122
    %1124 = vmatprep.subr.bf16.mxu0 0
    %1125 = vmatpush1.bf16.msra.mxu0 %v382
    %1126 = vmatprep.subr.bf16.mxu0 0
    %1127 = vmatpush1.bf16.msra.mxu0 %v383
    %1128 = vmatprep.subr.bf16.mxu0 0
    %1129 = vmatpush1.bf16.msra.mxu0 %v384
    %1130 = vmatprep.subr.bf16.mxu0 0
    %1131 = vmatpush1.bf16.msra.mxu0 %v385
    %1132 = vmatprep.subr.bf16.mxu0 0
    %1133 = vmatpush1.bf16.msra.mxu0 %v386
    %1134 = vmatprep.subr.bf16.mxu0 0
    %1135 = vmatpush1.bf16.msra.mxu0 %v387
    %1136 = vmatprep.subr.bf16.mxu0 0
    %1137 = vmatpush1.bf16.msra.mxu0 %v388
    %1138 = vmatprep.subr.bf16.mxu0 0
    %1139 = vmatpush1.bf16.msra.mxu0 %v389
    %1140 = vmatprep.subr.bf16.mxu0 0
    %1141 = vmatpush1.bf16.msra.mxu0 0
    %1142 = vmatprep.subr.bf16.mxu0 0
    %1143 = vmatpush1.bf16.msra.mxu0 0
    %1144 = vmatprep.subr.bf16.mxu0 0
    %1145 = vmatpush1.bf16.msra.mxu0 0
    %1146 = vmatprep.subr.bf16.mxu0 0
    %1147 = vmatpush1.bf16.msra.mxu0 0
    %1148 = vmatprep.subr.bf16.mxu0 0
    %1149 = vmatpush1.bf16.msra.mxu0 0
    %1150 = vmatprep.subr.bf16.mxu0 0
    %1151 = vmatpush1.bf16.msra.mxu0 0
    %1152 = vmatprep.subr.bf16.mxu0 0
    %1153 = vmatpush1.bf16.msra.mxu0 0
    %1154 = vmatprep.subr.bf16.mxu0 0
    %1155 = vmatpush1.bf16.msra.mxu0 0
    %1156 = vmatprep.mubr.bf16.mxu0 0
    %1157 = vmatmul.mubr.bf16.gmra.mrb[0].mxu0 %v1123
    %v1158 = vpop.f32.mrb[0].mxu0
    %v1159 = vadd.f32 0.0, %v1158
    %v1160 = vpop.f32.mrb[0].mxu0
    %v1161 = vpop.f32.mrb[0].mxu0
    %v1162 = vpop.f32.mrb[0].mxu0
    %1163 = vdwg.mxu0
    %1164 = vmatprep.subr.bf16.mxu0 0
    %1165 = vmatpush1.bf16.msra.mxu0 %v470
    %1166 = vmatprep.subr.bf16.mxu0 0
    %1167 = vmatpush1.bf16.msra.mxu0 %v471
    %1168 = vmatprep.subr.bf16.mxu0 0
    %1169 = vmatpush1.bf16.msra.mxu0 %v472
    %1170 = vmatprep.subr.bf16.mxu0 0
    %1171 = vmatpush1.bf16.msra.mxu0 %v473
    %1172 = vmatprep.subr.bf16.mxu0 0
    %1173 = vmatpush1.bf16.msra.mxu0 %v474
    %1174 = vmatprep.subr.bf16.mxu0 0
    %1175 = vmatpush1.bf16.msra.mxu0 %v475
    %1176 = vmatprep.subr.bf16.mxu0 0
    %1177 = vmatpush1.bf16.msra.mxu0 %v476
    %1178 = vmatprep.subr.bf16.mxu0 0
    %1179 = vmatpush1.bf16.msra.mxu0 %v477
    %1180 = vmatprep.subr.bf16.mxu0 0
    %1181 = vmatpush1.bf16.msra.mxu0 0
    %1182 = vmatprep.subr.bf16.mxu0 0
    %1183 = vmatpush1.bf16.msra.mxu0 0
    %1184 = vmatprep.subr.bf16.mxu0 0
    %1185 = vmatpush1.bf16.msra.mxu0 0
    %1186 = vmatprep.subr.bf16.mxu0 0
    %1187 = vmatpush1.bf16.msra.mxu0 0
    %1188 = vmatprep.subr.bf16.mxu0 0
    %1189 = vmatpush1.bf16.msra.mxu0 0
    %1190 = vmatprep.subr.bf16.mxu0 0
    %1191 = vmatpush1.bf16.msra.mxu0 0
    %1192 = vmatprep.subr.bf16.mxu0 0
    %1193 = vmatpush1.bf16.msra.mxu0 0
    %1194 = vmatprep.subr.bf16.mxu0 0
    %1195 = vmatpush1.bf16.msra.mxu0 0
    %1196 = vmatprep.mubr.bf16.mxu0 0
    %1197 = vmatmul.mubr.bf16.gmra.mrb[0].mxu0 %v1080
    %v1198 = vpop.f32.mrb[0].mxu0
    %v1199 = vadd.f32 0.0, %v1198
    %v1200 = vpop.f32.mrb[0].mxu0
    %v1201 = vpop.f32.mrb[0].mxu0
    %v1202 = vpop.f32.mrb[0].mxu0
    %1203 = vdwg.mxu0
    %v1204 = vadd.f32 %v284, %v1199
    %v1205 = vtanh.pop %v1204
    %v1206 = vpack.c.bf16 %v1205, %v1205
    %1207 = vmatprep.subr.bf16.mxu0 0
    %1208 = vmatpush1.bf16.msra.mxu0 %v561
    %1209 = vmatprep.subr.bf16.mxu0 0
    %1210 = vmatpush1.bf16.msra.mxu0 %v562
    %1211 = vmatprep.subr.bf16.mxu0 0
    %1212 = vmatpush1.bf16.msra.mxu0 %v563
    %1213 = vmatprep.subr.bf16.mxu0 0
    %1214 = vmatpush1.bf16.msra.mxu0 %v564
    %1215 = vmatprep.subr.bf16.mxu0 0
    %1216 = vmatpush1.bf16.msra.mxu0 %v565
    %1217 = vmatprep.subr.bf16.mxu0 0
    %1218 = vmatpush1.bf16.msra.mxu0 %v566
    %1219 = vmatprep.subr.bf16.mxu0 0
    %1220 = vmatpush1.bf16.msra.mxu0 %v567
    %1221 = vmatprep.subr.bf16.mxu0 0
    %1222 = vmatpush1.bf16.msra.mxu0 %v568
    %1223 = vmatprep.subr.bf16.mxu0 0
    %1224 = vmatpush1.bf16.msra.mxu0 0
    %1225 = vmatprep.subr.bf16.mxu0 0
    %1226 = vmatpush1.bf16.msra.mxu0 0
    %1227 = vmatprep.subr.bf16.mxu0 0
    %1228 = vmatpush1.bf16.msra.mxu0 0
    %1229 = vmatprep.subr.bf16.mxu0 0
    %1230 = vmatpush1.bf16.msra.mxu0 0
    %1231 = vmatprep.subr.bf16.mxu0 0
    %1232 = vmatpush1.bf16.msra.mxu0 0
    %1233 = vmatprep.subr.bf16.mxu0 0
    %1234 = vmatpush1.bf16.msra.mxu0 0
    %1235 = vmatprep.subr.bf16.mxu0 0
    %1236 = vmatpush1.bf16.msra.mxu0 0
    %1237 = vmatprep.subr.bf16.mxu0 0
    %1238 = vmatpush1.bf16.msra.mxu0 0
    %1239 = vmatprep.mubr.bf16.mxu0 0
    %1240 = vmatmul.mubr.bf16.gmra.mrb[0].mxu0 %v1206
    %v1241 = vpop.f32.mrb[0].mxu0
    %v1242 = vadd.f32 %v1159, %v1241
    %v1243 = vpop.f32.mrb[0].mxu0
    %v1244 = vpop.f32.mrb[0].mxu0
    %v1245 = vpop.f32.mrb[0].mxu0
    %1246 = vdwg.mxu0
    %v1247 = vadd.f32 %v1242, %v348
    %v1248 = vtanh.pop %v1247
    %v1249 = vpack.c.bf16 %v1248, %v1248
    %1250 = vmatprep.subr.bf16.mxu0 0
    %1251 = vmatpush1.bf16.msra.mxu0 %v382
    %1252 = vmatprep.subr.bf16.mxu0 0
    %1253 = vmatpush1.bf16.msra.mxu0 %v383
    %1254 = vmatprep.subr.bf16.mxu0 0
    %1255 = vmatpush1.bf16.msra.mxu0 %v384
    %1256 = vmatprep.subr.bf16.mxu0 0
    %1257 = vmatpush1.bf16.msra.mxu0 %v385
    %1258 = vmatprep.subr.bf16.mxu0 0
    %1259 = vmatpush1.bf16.msra.mxu0 %v386
    %1260 = vmatprep.subr.bf16.mxu0 0
    %1261 = vmatpush1.bf16.msra.mxu0 %v387
    %1262 = vmatprep.subr.bf16.mxu0 0
    %1263 = vmatpush1.bf16.msra.mxu0 %v388
    %1264 = vmatprep.subr.bf16.mxu0 0
    %1265 = vmatpush1.bf16.msra.mxu0 %v389
    %1266 = vmatprep.subr.bf16.mxu0 0
    %1267 = vmatpush1.bf16.msra.mxu0 0
    %1268 = vmatprep.subr.bf16.mxu0 0
    %1269 = vmatpush1.bf16.msra.mxu0 0
    %1270 = vmatprep.subr.bf16.mxu0 0
    %1271 = vmatpush1.bf16.msra.mxu0 0
    %1272 = vmatprep.subr.bf16.mxu0 0
    %1273 = vmatpush1.bf16.msra.mxu0 0
    %1274 = vmatprep.subr.bf16.mxu0 0
    %1275 = vmatpush1.bf16.msra.mxu0 0
    %1276 = vmatprep.subr.bf16.mxu0 0
    %1277 = vmatpush1.bf16.msra.mxu0 0
    %1278 = vmatprep.subr.bf16.mxu0 0
    %1279 = vmatpush1.bf16.msra.mxu0 0
    %1280 = vmatprep.subr.bf16.mxu0 0
    %1281 = vmatpush1.bf16.msra.mxu0 0
    %1282 = vmatprep.mubr.bf16.mxu0 0
    %1283 = vmatmul.mubr.bf16.gmra.mrb[0].mxu0 %v1249
    %v1284 = vpop.f32.mrb[0].mxu0
    %v1285 = vadd.f32 0.0, %v1284
    %v1286 = vpop.f32.mrb[0].mxu0
    %v1287 = vpop.f32.mrb[0].mxu0
    %v1288 = vpop.f32.mrb[0].mxu0
    %1289 = vdwg.mxu0
    %1290 = vmatprep.subr.bf16.mxu0 0
    %1291 = vmatpush1.bf16.msra.mxu0 %v470
    %1292 = vmatprep.subr.bf16.mxu0 0
    %1293 = vmatpush1.bf16.msra.mxu0 %v471
    %1294 = vmatprep.subr.bf16.mxu0 0
    %1295 = vmatpush1.bf16.msra.mxu0 %v472
    %1296 = vmatprep.subr.bf16.mxu0 0
    %1297 = vmatpush1.bf16.msra.mxu0 %v473
    %1298 = vmatprep.subr.bf16.mxu0 0
    %1299 = vmatpush1.bf16.msra.mxu0 %v474
    %1300 = vmatprep.subr.bf16.mxu0 0
    %1301 = vmatpush1.bf16.msra.mxu0 %v475
    %1302 = vmatprep.subr.bf16.mxu0 0
    %1303 = vmatpush1.bf16.msra.mxu0 %v476
    %1304 = vmatprep.subr.bf16.mxu0 0
    %1305 = vmatpush1.bf16.msra.mxu0 %v477
    %1306 = vmatprep.subr.bf16.mxu0 0
    %1307 = vmatpush1.bf16.msra.mxu0 0
    %1308 = vmatprep.subr.bf16.mxu0 0
    %1309 = vmatpush1.bf16.msra.mxu0 0
    %1310 = vmatprep.subr.bf16.mxu0 0
    %1311 = vmatpush1.bf16.msra.mxu0 0
    %1312 = vmatprep.subr.bf16.mxu0 0
    %1313 = vmatpush1.bf16.msra.mxu0 0
    %1314 = vmatprep.subr.bf16.mxu0 0
    %1315 = vmatpush1.bf16.msra.mxu0 0
    %1316 = vmatprep.subr.bf16.mxu0 0
    %1317 = vmatpush1.bf16.msra.mxu0 0
    %1318 = vmatprep.subr.bf16.mxu0 0
    %1319 = vmatpush1.bf16.msra.mxu0 0
    %1320 = vmatprep.subr.bf16.mxu0 0
    %1321 = vmatpush1.bf16.msra.mxu0 0
    %1322 = vmatprep.mubr.bf16.mxu0 0
    %1323 = vmatmul.mubr.bf16.gmra.mrb[0].mxu0 %v1206
    %v1324 = vpop.f32.mrb[0].mxu0
    %v1325 = vadd.f32 0.0, %v1324
    %v1326 = vpop.f32.mrb[0].mxu0
    %v1327 = vpop.f32.mrb[0].mxu0
    %v1328 = vpop.f32.mrb[0].mxu0
    %1329 = vdwg.mxu0
    %v1330 = vadd.f32 %v289, %v1325
    %v1331 = vtanh.pop %v1330
    %v1332 = vpack.c.bf16 %v1331, %v1331
    %1333 = vmatprep.subr.bf16.mxu0 0
    %1334 = vmatpush1.bf16.msra.mxu0 %v561
    %1335 = vmatprep.subr.bf16.mxu0 0
    %1336 = vmatpush1.bf16.msra.mxu0 %v562
    %1337 = vmatprep.subr.bf16.mxu0 0
    %1338 = vmatpush1.bf16.msra.mxu0 %v563
    %1339 = vmatprep.subr.bf16.mxu0 0
    %1340 = vmatpush1.bf16.msra.mxu0 %v564
    %1341 = vmatprep.subr.bf16.mxu0 0
    %1342 = vmatpush1.bf16.msra.mxu0 %v565
    %1343 = vmatprep.subr.bf16.mxu0 0
    %1344 = vmatpush1.bf16.msra.mxu0 %v566
    %1345 = vmatprep.subr.bf16.mxu0 0
    %1346 = vmatpush1.bf16.msra.mxu0 %v567
    %1347 = vmatprep.subr.bf16.mxu0 0
    %1348 = vmatpush1.bf16.msra.mxu0 %v568
    %1349 = vmatprep.subr.bf16.mxu0 0
    %1350 = vmatpush1.bf16.msra.mxu0 0
    %1351 = vmatprep.subr.bf16.mxu0 0
    %1352 = vmatpush1.bf16.msra.mxu0 0
    %1353 = vmatprep.subr.bf16.mxu0 0
    %1354 = vmatpush1.bf16.msra.mxu0 0
    %1355 = vmatprep.subr.bf16.mxu0 0
    %1356 = vmatpush1.bf16.msra.mxu0 0
    %1357 = vmatprep.subr.bf16.mxu0 0
    %1358 = vmatpush1.bf16.msra.mxu0 0
    %1359 = vmatprep.subr.bf16.mxu0 0
    %1360 = vmatpush1.bf16.msra.mxu0 0
    %1361 = vmatprep.subr.bf16.mxu0 0
    %1362 = vmatpush1.bf16.msra.mxu0 0
    %1363 = vmatprep.subr.bf16.mxu0 0
    %1364 = vmatpush1.bf16.msra.mxu0 0
    %1365 = vmatprep.mubr.bf16.mxu0 0
    %1366 = vmatmul.mubr.bf16.gmra.mrb[0].mxu0 %v1332
    %v1367 = vpop.f32.mrb[0].mxu0
    %v1368 = vadd.f32 %v1285, %v1367
    %v1369 = vpop.f32.mrb[0].mxu0
    %v1370 = vpop.f32.mrb[0].mxu0
    %v1371 = vpop.f32.mrb[0].mxu0
    %1372 = vdwg.mxu0
    %v1373 = vadd.f32 %v1368, %v348
    %v1374 = vtanh.pop %v1373
    %v1375 = vpack.c.bf16 %v1374, %v1374
    %1376 = vmatprep.subr.bf16.mxu0 0
    %1377 = vmatpush1.bf16.msra.mxu0 %v382
    %1378 = vmatprep.subr.bf16.mxu0 0
    %1379 = vmatpush1.bf16.msra.mxu0 %v383
    %1380 = vmatprep.subr.bf16.mxu0 0
    %1381 = vmatpush1.bf16.msra.mxu0 %v384
    %1382 = vmatprep.subr.bf16.mxu0 0
    %1383 = vmatpush1.bf16.msra.mxu0 %v385
    %1384 = vmatprep.subr.bf16.mxu0 0
    %1385 = vmatpush1.bf16.msra.mxu0 %v386
    %1386 = vmatprep.subr.bf16.mxu0 0
    %1387 = vmatpush1.bf16.msra.mxu0 %v387
    %1388 = vmatprep.subr.bf16.mxu0 0
    %1389 = vmatpush1.bf16.msra.mxu0 %v388
    %1390 = vmatprep.subr.bf16.mxu0 0
    %1391 = vmatpush1.bf16.msra.mxu0 %v389
    %1392 = vmatprep.subr.bf16.mxu0 0
    %1393 = vmatpush1.bf16.msra.mxu0 0
    %1394 = vmatprep.subr.bf16.mxu0 0
    %1395 = vmatpush1.bf16.msra.mxu0 0
    %1396 = vmatprep.subr.bf16.mxu0 0
    %1397 = vmatpush1.bf16.msra.mxu0 0
    %1398 = vmatprep.subr.bf16.mxu0 0
    %1399 = vmatpush1.bf16.msra.mxu0 0
    %1400 = vmatprep.subr.bf16.mxu0 0
    %1401 = vmatpush1.bf16.msra.mxu0 0
    %1402 = vmatprep.subr.bf16.mxu0 0
    %1403 = vmatpush1.bf16.msra.mxu0 0
    %1404 = vmatprep.subr.bf16.mxu0 0
    %1405 = vmatpush1.bf16.msra.mxu0 0
    %1406 = vmatprep.subr.bf16.mxu0 0
    %1407 = vmatpush1.bf16.msra.mxu0 0
    %1408 = vmatprep.mubr.bf16.mxu0 0
    %1409 = vmatmul.mubr.bf16.gmra.mrb[0].mxu0 %v1375
    %v1410 = vpop.f32.mrb[0].mxu0
    %v1411 = vadd.f32 0.0, %v1410
    %v1412 = vpop.f32.mrb[0].mxu0
    %v1413 = vpop.f32.mrb[0].mxu0
    %v1414 = vpop.f32.mrb[0].mxu0
    %1415 = vdwg.mxu0
    %1416 = vmatprep.subr.bf16.mxu0 0
    %1417 = vmatpush1.bf16.msra.mxu0 %v470
    %1418 = vmatprep.subr.bf16.mxu0 0
    %1419 = vmatpush1.bf16.msra.mxu0 %v471
    %1420 = vmatprep.subr.bf16.mxu0 0
    %1421 = vmatpush1.bf16.msra.mxu0 %v472
    %1422 = vmatprep.subr.bf16.mxu0 0
    %1423 = vmatpush1.bf16.msra.mxu0 %v473
    %1424 = vmatprep.subr.bf16.mxu0 0
    %1425 = vmatpush1.bf16.msra.mxu0 %v474
    %1426 = vmatprep.subr.bf16.mxu0 0
    %1427 = vmatpush1.bf16.msra.mxu0 %v475
    %1428 = vmatprep.subr.bf16.mxu0 0
    %1429 = vmatpush1.bf16.msra.mxu0 %v476
    %1430 = vmatprep.subr.bf16.mxu0 0
    %1431 = vmatpush1.bf16.msra.mxu0 %v477
    %1432 = vmatprep.subr.bf16.mxu0 0
    %1433 = vmatpush1.bf16.msra.mxu0 0
    %1434 = vmatprep.subr.bf16.mxu0 0
    %1435 = vmatpush1.bf16.msra.mxu0 0
    %1436 = vmatprep.subr.bf16.mxu0 0
    %1437 = vmatpush1.bf16.msra.mxu0 0
    %1438 = vmatprep.subr.bf16.mxu0 0
    %1439 = vmatpush1.bf16.msra.mxu0 0
    %1440 = vmatprep.subr.bf16.mxu0 0
    %1441 = vmatpush1.bf16.msra.mxu0 0
    %1442 = vmatprep.subr.bf16.mxu0 0
    %1443 = vmatpush1.bf16.msra.mxu0 0
    %1444 = vmatprep.subr.bf16.mxu0 0
    %1445 = vmatpush1.bf16.msra.mxu0 0
    %1446 = vmatprep.subr.bf16.mxu0 0
    %1447 = vmatpush1.bf16.msra.mxu0 0
    %1448 = vmatprep.mubr.bf16.mxu0 0
    %1449 = vmatmul.mubr.bf16.gmra.mrb[0].mxu0 %v1332
    %v1450 = vpop.f32.mrb[0].mxu0
    %v1451 = vadd.f32 0.0, %v1450
    %v1452 = vpop.f32.mrb[0].mxu0
    %v1453 = vpop.f32.mrb[0].mxu0
    %v1454 = vpop.f32.mrb[0].mxu0
    %1455 = vdwg.mxu0
    %v1456 = vadd.f32 %v292, %v1451
    %v1457 = vtanh.pop %v1456
    %v1458 = vpack.c.bf16 %v1457, %v1457
    %1459 = vmatprep.subr.bf16.mxu0 0
    %1460 = vmatpush1.bf16.msra.mxu0 %v561
    %1461 = vmatprep.subr.bf16.mxu0 0
    %1462 = vmatpush1.bf16.msra.mxu0 %v562
    %1463 = vmatprep.subr.bf16.mxu0 0
    %1464 = vmatpush1.bf16.msra.mxu0 %v563
    %1465 = vmatprep.subr.bf16.mxu0 0
    %1466 = vmatpush1.bf16.msra.mxu0 %v564
    %1467 = vmatprep.subr.bf16.mxu0 0
    %1468 = vmatpush1.bf16.msra.mxu0 %v565
    %1469 = vmatprep.subr.bf16.mxu0 0
    %1470 = vmatpush1.bf16.msra.mxu0 %v566
    %1471 = vmatprep.subr.bf16.mxu0 0
    %1472 = vmatpush1.bf16.msra.mxu0 %v567
    %1473 = vmatprep.subr.bf16.mxu0 0
    %1474 = vmatpush1.bf16.msra.mxu0 %v568
    %1475 = vmatprep.subr.bf16.mxu0 0
    %1476 = vmatpush1.bf16.msra.mxu0 0
    %1477 = vmatprep.subr.bf16.mxu0 0
    %1478 = vmatpush1.bf16.msra.mxu0 0
    %1479 = vmatprep.subr.bf16.mxu0 0
    %1480 = vmatpush1.bf16.msra.mxu0 0
    %1481 = vmatprep.subr.bf16.mxu0 0
    %1482 = vmatpush1.bf16.msra.mxu0 0
    %1483 = vmatprep.subr.bf16.mxu0 0
    %1484 = vmatpush1.bf16.msra.mxu0 0
    %1485 = vmatprep.subr.bf16.mxu0 0
    %1486 = vmatpush1.bf16.msra.mxu0 0
    %1487 = vmatprep.subr.bf16.mxu0 0
    %1488 = vmatpush1.bf16.msra.mxu0 0
    %1489 = vmatprep.subr.bf16.mxu0 0
    %1490 = vmatpush1.bf16.msra.mxu0 0
    %1491 = vmatprep.mubr.bf16.mxu0 0
    %1492 = vmatmul.mubr.bf16.gmra.mrb[0].mxu0 %v1458
    %v1493 = vpop.f32.mrb[0].mxu0
    %v1494 = vadd.f32 %v1411, %v1493
    %v1495 = vpop.f32.mrb[0].mxu0
    %v1496 = vpop.f32.mrb[0].mxu0
    %v1497 = vpop.f32.mrb[0].mxu0
    %1498 = vdwg.mxu0
    %v1499 = vadd.f32 %v1494, %v348
    %v1500 = vtanh.pop %v1499
    %1501 = vst [vmem:[#allocation14] sm:$0xff] %v1500
    // Predicated region
    $region58: #{tpu_custom_call.1} parent=1 // pred_check
      _
    $region59: #{tpu_custom_call.1} parent=1 // pred_check_branch
      %1503 = sbr.rel (0) target = $region61
    $region60: #{tpu_custom_call.1} parent=1 // pred_region
      %s1505 = ssub.s32 128, 128
      %1506 = vsyncadd [#allocation4], %s1505
      %s1508 = sshll.u32 [#allocation14], 4
      %s1509 = int_to_ptr.vmem [resolvable:$true] %s1508
      %1511 = dma.vmem_to_hbm [thread:$0]  %s1509, 128, %s7, [#allocation4]
    $region61: #{tpu_custom_call.1} parent=1 // pred_fallthru
      _
    // Predicated region
    $region62: #{tpu_custom_call.1} parent=1 // pred_check
      _
    $region63: #{tpu_custom_call.1} parent=1 // pred_check_branch
      %1513 = sbr.rel (0) target = $region65
    $region64: #{tpu_custom_call.1} parent=1 // pred_region
      %1514 = dma.done [#allocation4], 128
    $region65: #{tpu_custom_call.1} parent=1 // pred_fallthru
      _
    %1515 = vsyncpa [#allocation3], 1
    %1516 = vsyncpa [#allocation6], 1
    %1517 = vsyncpa [#allocation9], 1
    %1518 = vsyncpa [#allocation12], 1
    %1519 = vsyncpa [#allocation4], 1

</llo_original>
